<compile_context>
chip_gen: v7x
topology: tpu7x:2x2x1
jax: 0.10.0
libtpu: 0.0.40
codegen_flags: <defaults>
</compile_context>

<pallas_src>
import jax
import jax.numpy as jnp
from jax.experimental import pallas as pl
from jax.experimental.pallas import tpu as pltpu


# ---------------------------------------------------------------------------
# Pallas kernels
# ---------------------------------------------------------------------------
def _enc1_kernel(w_ref, p_ref, o_ref):
    # (Co, K) @ (K, M) -> (Co, M); lanes = flattened (n, d, h, w) voxels.
    o_ref[...] = jnp.dot(
        w_ref[...], p_ref[...], preferred_element_type=jnp.float32
    ).astype(o_ref.dtype)


def _enc2_up_kernel(w2_ref, p2_ref, wup_ref, bup_ref, o_ref):
    # encoder_block2 GEMM chained with the ConvTranspose3d (k=2, s=2) GEMM.
    # The up-conv consumes encoder2's output voxel-wise (no im2col in between),
    # so the (16, M) intermediate stays in VMEM / vregs.
    y2 = jnp.dot(w2_ref[...], p2_ref[...], preferred_element_type=jnp.float32)
    up = jnp.dot(
        wup_ref[...], y2.astype(jnp.bfloat16), preferred_element_type=jnp.float32
    )
    o_ref[...] = (up + bup_ref[...]).astype(o_ref.dtype)


def _conv1_tail_kernel(w_ref, p_ref, tp_ref, o_ref, acc_ref):
    # K-tiled GEMM for OutputTransition.conv1, then at the last K step the
    # fused tail: conv1 bias + BN (train-mode batch stats) + ReLU + 1x1x1 conv
    # + softmax over the 2 channels.  acc_ref: (2, M) f32 VMEM accumulator.
    #
    # tail params tp_ref (2, 8) f32:
    #   col0 = bn gamma, col1 = bn beta,
    #   col2 / col3 = 1x1x1 conv weight (per input channel),
    #   col4 = 1x1x1 conv bias, col5 = conv1 bias.
    k = pl.program_id(0)

    @pl.when(k == 0)
    def _():
        acc_ref[...] = jnp.zeros_like(acc_ref)

    acc_ref[...] += jnp.dot(
        w_ref[...], p_ref[...], preferred_element_type=jnp.float32
    )

    @pl.when(k == pl.num_programs(0) - 1)
    def _():
        eps = 1e-5
        z0 = acc_ref[0:1, :] + tp_ref[0:1, 5:6]   # conv1 bias, channel 0
        z1 = acc_ref[1:2, :] + tp_ref[1:2, 5:6]   # conv1 bias, channel 1

        def bn_relu(zc, gamma, beta):
            mu = jnp.mean(zc, axis=1, keepdims=True)
            var = jnp.mean((zc - mu) ** 2, axis=1, keepdims=True)  # biased (train)
            hc = (zc - mu) * jax.lax.rsqrt(var + eps) * gamma + beta
            return jnp.maximum(hc, 0.0)

        h0 = bn_relu(z0, tp_ref[0:1, 0:1], tp_ref[0:1, 1:2])
        h1 = bn_relu(z1, tp_ref[1:2, 0:1], tp_ref[1:2, 1:2])

        y0 = tp_ref[0:1, 2:3] * h0 + tp_ref[0:1, 3:4] * h1 + tp_ref[0:1, 4:5]
        y1 = tp_ref[1:2, 2:3] * h0 + tp_ref[1:2, 3:4] * h1 + tp_ref[1:2, 4:5]

        # softmax over the channel axis (2 channels); exact reciprocal so the
        # per-voxel sum is 1 to f32 precision.
        zmax = jnp.maximum(y0, y1)
        e0 = jnp.exp(y0 - zmax)
        e1 = jnp.exp(y1 - zmax)
        inv = 1.0 / (e0 + e1)
        o_ref[0:1, :] = e0 * inv
        o_ref[1:2, :] = e1 * inv


# ---------------------------------------------------------------------------
# pallas_call wrappers
# ---------------------------------------------------------------------------
def _vmem_spec():
    return pl.BlockSpec(memory_space=pltpu.MemorySpace.VMEM)


def _encoder1_gemm(w_mat, patch):
    co, m = w_mat.shape[0], patch.shape[1]
    return pl.pallas_call(
        _enc1_kernel,
        out_shape=jax.ShapeDtypeStruct((co, m), jnp.bfloat16),
        in_specs=[_vmem_spec() for _ in range(2)],
        out_specs=_vmem_spec(),
    )(w_mat, patch)


def _encoder2_upconv_gemm(w2_mat, patch2, wup_mat, bup_col):
    co, m = wup_mat.shape[0], patch2.shape[1]
    return pl.pallas_call(
        _enc2_up_kernel,
        out_shape=jax.ShapeDtypeStruct((co, m), jnp.bfloat16),
        in_specs=[_vmem_spec() for _ in range(4)],
        out_specs=_vmem_spec(),
    )(w2_mat, patch2, wup_mat, bup_col)


def _conv1_bn_softmax(w_mat, patch, tail_par, *, kt=256):
    # w_mat: (2, Kp) bf16, patch: (Kp, M) bf16 with Kp already a multiple of kt.
    co, kp = w_mat.shape
    m = patch.shape[1]
    assert kp % kt == 0 and patch.shape[0] == kp
    return pl.pallas_call(
        _conv1_tail_kernel,
        out_shape=jax.ShapeDtypeStruct((co, m), jnp.float32),
        grid=(kp // kt,),
        in_specs=[
            pl.BlockSpec((co, kt), lambda i: (0, i)),
            pl.BlockSpec((kt, m), lambda i: (i, 0)),
            pl.BlockSpec((2, 8), lambda i: (0, 0)),
        ],
        out_specs=pl.BlockSpec((co, m), lambda i: (0, 0)),
        scratch_shapes=[pltpu.VMEM((co, m), jnp.float32)],
        compiler_params=pltpu.CompilerParams(dimension_semantics=("arbitrary",)),
    )(w_mat, patch, tail_par)


# ---------------------------------------------------------------------------
# Glue (plain JAX, tiny): patch matrices built directly in (K, M) orientation
# ---------------------------------------------------------------------------
def _im2col_kM(v_cf, k, stride, padding, dilation,
               out_dtype=jnp.bfloat16, k_pad_to=None):
    """Channels-first volume (C, N, D, H, W) -> patch matrix (k^3*C, N*Do*Ho*Wo).

    Row order: (kd, kh, kw) major, input channel minor -- matches
    _conv_weight_to_gemm.  Columns: flattened (n, do, ho, wo), which is also
    the lane axis of every Pallas GEMM in this file (no transposes between
    stages).  If k_pad_to is given, zero rows are appended inside the single
    concatenate so K is padded without a second full-matrix copy."""
    c, n, d, h, w = v_cf.shape
    do = (d + 2 * padding - dilation * (k - 1) - 1) // stride + 1
    ho = (h + 2 * padding - dilation * (k - 1) - 1) // stride + 1
    wo = (w + 2 * padding - dilation * (k - 1) - 1) // stride + 1
    vp = jnp.pad(
        v_cf, ((0, 0), (0, 0), (padding,) * 2, (padding,) * 2, (padding,) * 2)
    ).astype(out_dtype)
    m = n * do * ho * wo
    rows = []
    for kd in range(k):
        for kh in range(k):
            for kw in range(k):
                sl = vp[
                    :, :,
                    kd * dilation: kd * dilation + (do - 1) * stride + 1: stride,
                    kh * dilation: kh * dilation + (ho - 1) * stride + 1: stride,
                    kw * dilation: kw * dilation + (wo - 1) * stride + 1: stride,
                ]
                rows.append(sl.reshape(c, m))
    krows = k * k * k * c
    if k_pad_to is not None and k_pad_to > krows:
        rows.append(jnp.zeros((k_pad_to - krows, m), out_dtype))
    patch = jnp.concatenate(rows, axis=0)
    return patch, (n, do, ho, wo)


def _conv_weight_to_gemm(w, dtype=jnp.bfloat16):
    """PyTorch Conv3d weight (Cout, Cin, kd, kh, kw) -> (Cout, k^3*Cin) with
    column order (kd, kh, kw, ci), matching _im2col_kM's row order."""
    cout = w.shape[0]
    return w.transpose(0, 2, 3, 4, 1).reshape(cout, -1).astype(dtype)


# ---------------------------------------------------------------------------
# ArtiNet forward
# ---------------------------------------------------------------------------
@jax.jit
def artinet_forward(x, params):
    n = x.shape[0]
    kt = 256  # K-tile for the conv1 GEMM

    # --- weight prep (tiny; bf16 GEMM operands, f32 accumulation in-kernel) --
    w1 = _conv_weight_to_gemm(params["w_enc1"])                    # (16, 27)
    w2 = _conv_weight_to_gemm(params["w_enc2"])                    # (16, 432)
    ci_up, co_up = params["w_up"].shape[0], params["w_up"].shape[1]
    wup = (params["w_up"].transpose(1, 2, 3, 4, 0)                 # (co,kd,kh,kw,ci)
           .reshape(co_up * 8, ci_up).astype(jnp.bfloat16))        # (64, 16)
    bup = jnp.repeat(params["b_up"], 8).reshape(co_up * 8, 1)      # f32, per GEMM row
    w3 = _conv_weight_to_gemm(params["w_oc1"])                     # (2, 1000)
    k3_rows = w3.shape[1]
    k3_pad = -(-k3_rows // kt) * kt                                # 1024
    w3 = jnp.pad(w3, ((0, 0), (0, k3_pad - k3_rows)))              # (2, 1024), tiny
    tail_par = jnp.zeros((2, 8), jnp.float32)
    tail_par = tail_par.at[:, 0].set(params["bn_w"])
    tail_par = tail_par.at[:, 1].set(params["bn_b"])
    tail_par = tail_par.at[:, 2:4].set(params["w_oc2"])
    tail_par = tail_par.at[:, 4].set(params["b_oc2"])
    tail_par = tail_par.at[:, 5].set(params["b_oc1"])              # conv1 bias

    # --- encoder_block1: Conv3d(1, 16, k=3, p=1, s=2, bias=False) ------------
    x_cf = jnp.transpose(x, (1, 0, 2, 3, 4))                       # (1, N, 8, 8, 8)
    p1, (_, d1, h1, w1s) = _im2col_kM(x_cf, k=3, stride=2, padding=1, dilation=1)
    y1 = _encoder1_gemm(w1, p1)                                    # (16, N*64) bf16

    # --- encoder_block2 (dilated) fused with up_conv (ConvTranspose3d) -------
    v1 = y1.reshape(y1.shape[0], n, d1, h1, w1s)                   # (16, N, 4, 4, 4)
    p2, (_, d2, h2, w2s) = _im2col_kM(v1, k=3, stride=1, padding=3, dilation=3)
    up = _encoder2_upconv_gemm(w2, p2, wup, bup)                   # (64, N*64) bf16

    # --- scatter the 2x2x2 up-conv blocks (stride == kernel, no overlap) -----
    u = up.reshape(co_up, 2, 2, 2, n, d2, h2, w2s)                 # (co,kd,kh,kw,n,...)
    u = u.transpose(0, 4, 5, 1, 6, 2, 7, 3)                        # (co,n,d2,kd,h2,kh,w2,kw)
    u = u.reshape(co_up, n, 2 * d2, 2 * h2, 2 * w2s)               # (8, N, 8, 8, 8)

    # --- OutputTransition: Conv3d(8,2,k=5,p=2) + BN + ReLU + 1x1 + softmax ---
    p3, (_, d3, h3, w3s) = _im2col_kM(
        u, k=5, stride=1, padding=2, dilation=1, k_pad_to=k3_pad)  # (1024, M)
    out_cm = _conv1_bn_softmax(w3, p3, tail_par, kt=kt)            # (2, M) f32

    out = out_cm.reshape(2, n, d3, h3, w3s).transpose(1, 0, 2, 3, 4)
    return out                                                     # (N, 2, D, H, W)


# ---------------------------------------------------------------------------
# Deterministic parameter construction (synthetic; no checkpoint load)
# ---------------------------------------------------------------------------
def make_params(key):
    ks = jax.random.split(key, 6)

    def _w(k, shape):
        fan_in = 1
        for s in shape[1:]:
            fan_in *= s
        return jax.random.normal(k, shape, jnp.float32) / jnp.sqrt(float(fan_in))

    return {
        "w_enc1": _w(ks[0], (16, 1, 3, 3, 3)),    # Conv3d(1,16,3,p=1,s=2), no bias
        "w_enc2": _w(ks[1], (16, 16, 3, 3, 3)),   # Conv3d(16,16,3,p=3,dil=3), no bias
        "w_up":   _w(ks[2], (16, 8, 2, 2, 2)),    # ConvTranspose3d(16,8,2,s=2)
        "b_up":   0.01 * jnp.arange(8, dtype=jnp.float32),
        "w_oc1":  _w(ks[3], (2, 8, 5, 5, 5)),     # Conv3d(8,2,5,p=2)
        "b_oc1":  jnp.array([0.01, -0.02], jnp.float32),
        "bn_w":   jnp.ones((2,), jnp.float32),    # BatchNorm3d(2) gamma
        "bn_b":   jnp.zeros((2,), jnp.float32),   # BatchNorm3d(2) beta
        "w_oc2":  _w(ks[4], (2, 2, 1, 1, 1))[:, :, 0, 0, 0],  # 1x1x1 conv -> (2,2)
        "b_oc2":  jnp.array([0.03, -0.01], jnp.float32),
    }


if __name__ == "__main__":
    key = jax.random.PRNGKey(0)
    pkey, xkey = jax.random.split(key)
    params = make_params(pkey)

    # Input: NCDHW, small shape consistent with Conv3d(c=1, ...).
    x = jax.random.normal(xkey, (2, 1, 8, 8, 8), jnp.float32)

    out = artinet_forward(x, params)
    out = jax.block_until_ready(out)

    assert out.shape == (2, 2, 8, 8, 8), out.shape
    # softmax over the channel dim must sum to 1 everywhere
    assert bool(jnp.allclose(out.sum(axis=1), 1.0, atol=1e-4))
    assert bool(jnp.all(jnp.isfinite(out)))

    print("KERNEL_OK")
</pallas_src>

<mosaic_0001>
module attributes {stable_mosaic.version = 11 : i64} {
  func.func @_enc1_kernel(%arg0: memref<16x27xbf16, #tpu.memory_space<vmem>>, %arg1: memref<27x128xbf16, #tpu.memory_space<vmem>>, %arg2: memref<16x128xbf16, #tpu.memory_space<vmem>>) attributes {dimension_semantics = [], scalar_prefetch = 0 : i64, scratch_operands = 0 : i64, tpu.core_type = #tpu.core_type<tc>} {
    %c0 = arith.constant 0 : index
    %c0_0 = arith.constant 0 : index
    %0 = vector.load %arg0[%c0, %c0_0] : memref<16x27xbf16, #tpu.memory_space<vmem>>, vector<16x27xbf16>
    %c0_1 = arith.constant 0 : index
    %c0_2 = arith.constant 0 : index
    %1 = vector.load %arg1[%c0_1, %c0_2] : memref<27x128xbf16, #tpu.memory_space<vmem>>, vector<27x128xbf16>
    %cst = arith.constant dense<0.000000e+00> : vector<16x128xf32>
    %2 = tpu.matmul %0, %1, %cst {dimension_numbers = #tpu.dot_dimension_numbers<[1], [0], [0], [1], [0, 0, 1, 1], [], []>} : vector<16x27xbf16>, vector<27x128xbf16>, vector<16x128xf32> -> vector<16x128xf32>
    %3 = arith.truncf %2 : vector<16x128xf32> to vector<16x128xbf16>
    %c0_3 = arith.constant 0 : index
    %c0_4 = arith.constant 0 : index
    %4 = vector.load %arg2[%c0_3, %c0_4] : memref<16x128xbf16, #tpu.memory_space<vmem>>, vector<16x128xbf16>
    tpu.vector_store %arg2[%c0_3, %c0_4], %3 {strides = array<i32>} : memref<16x128xbf16, #tpu.memory_space<vmem>>, vector<16x128xbf16>,
    return
  }
}

module attributes {stable_mosaic.version = 11 : i64} {
  func.func @_enc2_up_kernel(%arg0: memref<16x432xbf16, #tpu.memory_space<vmem>>, %arg1: memref<432x128xbf16, #tpu.memory_space<vmem>>, %arg2: memref<64x16xbf16, #tpu.memory_space<vmem>>, %arg3: memref<64x1xf32, #tpu.memory_space<vmem>>, %arg4: memref<64x128xbf16, #tpu.memory_space<vmem>>) attributes {dimension_semantics = [], scalar_prefetch = 0 : i64, scratch_operands = 0 : i64, tpu.core_type = #tpu.core_type<tc>} {
    %c0 = arith.constant 0 : index
    %c0_0 = arith.constant 0 : index
    %0 = vector.load %arg0[%c0, %c0_0] : memref<16x432xbf16, #tpu.memory_space<vmem>>, vector<16x432xbf16>
    %c0_1 = arith.constant 0 : index
    %c0_2 = arith.constant 0 : index
    %1 = vector.load %arg1[%c0_1, %c0_2] : memref<432x128xbf16, #tpu.memory_space<vmem>>, vector<432x128xbf16>
    %cst = arith.constant dense<0.000000e+00> : vector<16x128xf32>
    %2 = tpu.matmul %0, %1, %cst {dimension_numbers = #tpu.dot_dimension_numbers<[1], [0], [0], [1], [0, 0, 1, 1], [], []>} : vector<16x432xbf16>, vector<432x128xbf16>, vector<16x128xf32> -> vector<16x128xf32>
    %c0_3 = arith.constant 0 : index
    %c0_4 = arith.constant 0 : index
    %3 = vector.load %arg2[%c0_3, %c0_4] : memref<64x16xbf16, #tpu.memory_space<vmem>>, vector<64x16xbf16>
    %4 = arith.truncf %2 : vector<16x128xf32> to vector<16x128xbf16>
    %cst_5 = arith.constant dense<0.000000e+00> : vector<64x128xf32>
    %5 = tpu.matmul %3, %4, %cst_5 {dimension_numbers = #tpu.dot_dimension_numbers<[1], [0], [0], [1], [0, 0, 1, 1], [], []>} : vector<64x16xbf16>, vector<16x128xbf16>, vector<64x128xf32> -> vector<64x128xf32>
    %c0_6 = arith.constant 0 : index
    %c0_7 = arith.constant 0 : index
    %6 = vector.load %arg3[%c0_6, %c0_7] : memref<64x1xf32, #tpu.memory_space<vmem>>, vector<64x1xf32>
    %7 = vector.broadcast %6 : vector<64x1xf32> to vector<64x128xf32>
    %8 = arith.addf %5, %7 : vector<64x128xf32>
    %9 = arith.truncf %8 : vector<64x128xf32> to vector<64x128xbf16>
    %c0_8 = arith.constant 0 : index
    %c0_9 = arith.constant 0 : index
    %10 = vector.load %arg4[%c0_8, %c0_9] : memref<64x128xbf16, #tpu.memory_space<vmem>>, vector<64x128xbf16>
    tpu.vector_store %arg4[%c0_8, %c0_9], %9 {strides = array<i32>} : memref<64x128xbf16, #tpu.memory_space<vmem>>, vector<64x128xbf16>,
    return
  }
}

module attributes {stable_mosaic.version = 11 : i64} {
  func.func @_conv1_tail_kernel(%arg0: i32, %arg1: memref<2x256xbf16, #tpu.memory_space<vmem>>, %arg2: memref<256x1024xbf16, #tpu.memory_space<vmem>>, %arg3: memref<2x8xf32, #tpu.memory_space<vmem>>, %arg4: memref<2x1024xf32, #tpu.memory_space<vmem>>, %arg5: memref<2x1024xf32, #tpu.memory_space<vmem>>) attributes {dimension_semantics = [#tpu.dimension_semantics<arbitrary>], iteration_bounds = array<i64: 4>, scalar_prefetch = 0 : i64, scratch_operands = 1 : i64, tpu.core_type = #tpu.core_type<tc>, window_params = [{transform_indices = @transform_0, window_bounds = array<i64: 2, 256>}, {transform_indices = @transform_1, window_bounds = array<i64: 256, 1024>}, {pipeline_mode = #tpu.pipeline_mode<synchronous>, transform_indices = @transform_2, window_bounds = array<i64: 2, 8>}, {pipeline_mode = #tpu.pipeline_mode<synchronous>, transform_indices = @transform_3, window_bounds = array<i64: 2, 1024>}]} {
    %c0_i32 = arith.constant 0 : i32
    %0 = arith.cmpi eq, %arg0, %c0_i32 : i32
    %1 = arith.extui %0 : i1 to i32
    %c0_i32_0 = arith.constant 0 : i32
    %2 = arith.cmpi ne, %1, %c0_i32_0 : i32
    scf.if %2 {
      %cst_9 = arith.constant 0.000000e+00 : f32
      %12 = vector.broadcast %cst_9 : f32 to vector<2x1024xf32>
      %c0_10 = arith.constant 0 : index
      %c0_11 = arith.constant 0 : index
      %13 = vector.load %arg5[%c0_10, %c0_11] : memref<2x1024xf32, #tpu.memory_space<vmem>>, vector<2x1024xf32>
      tpu.vector_store %arg5[%c0_10, %c0_11], %12 {strides = array<i32>} : memref<2x1024xf32, #tpu.memory_space<vmem>>, vector<2x1024xf32>,
    } else {
    }
    %c0 = arith.constant 0 : index
    %c0_1 = arith.constant 0 : index
    %3 = vector.load %arg5[%c0, %c0_1] : memref<2x1024xf32, #tpu.memory_space<vmem>>, vector<2x1024xf32>
    %c0_2 = arith.constant 0 : index
    %c0_3 = arith.constant 0 : index
    %4 = vector.load %arg1[%c0_2, %c0_3] : memref<2x256xbf16, #tpu.memory_space<vmem>>, vector<2x256xbf16>
    %c0_4 = arith.constant 0 : index
    %c0_5 = arith.constant 0 : index
    %5 = vector.load %arg2[%c0_4, %c0_5] : memref<256x1024xbf16, #tpu.memory_space<vmem>>, vector<256x1024xbf16>
    %cst = arith.constant dense<0.000000e+00> : vector<2x1024xf32>
    %6 = tpu.matmul %4, %5, %cst {dimension_numbers = #tpu.dot_dimension_numbers<[1], [0], [0], [1], [0, 0, 1, 1], [], []>} : vector<2x256xbf16>, vector<256x1024xbf16>, vector<2x1024xf32> -> vector<2x1024xf32>
    %7 = arith.addf %3, %6 : vector<2x1024xf32>
    %c0_6 = arith.constant 0 : index
    %c0_7 = arith.constant 0 : index
    %8 = vector.load %arg5[%c0_6, %c0_7] : memref<2x1024xf32, #tpu.memory_space<vmem>>, vector<2x1024xf32>
    tpu.vector_store %arg5[%c0_6, %c0_7], %7 {strides = array<i32>} : memref<2x1024xf32, #tpu.memory_space<vmem>>, vector<2x1024xf32>,
    %c3_i32 = arith.constant 3 : i32
    %9 = arith.cmpi eq, %arg0, %c3_i32 : i32
    %10 = arith.extui %9 : i1 to i32
    %c0_i32_8 = arith.constant 0 : i32
    %11 = arith.cmpi ne, %10, %c0_i32_8 : i32
    scf.if %11 {
      %c0_9 = arith.constant 0 : index
      %c0_10 = arith.constant 0 : index
      %12 = vector.load %arg5[%c0_9, %c0_10] : memref<2x1024xf32, #tpu.memory_space<vmem>>, vector<1x1024xf32>
      %c0_11 = arith.constant 0 : index
      %c5 = arith.constant 5 : index
      %13 = vector.load %arg3[%c0_11, %c5] : memref<2x8xf32, #tpu.memory_space<vmem>>, vector<1x1xf32>
      %14 = vector.broadcast %13 : vector<1x1xf32> to vector<1x1024xf32>
      %15 = arith.addf %12, %14 : vector<1x1024xf32>
      %c1 = arith.constant 1 : index
      %c0_12 = arith.constant 0 : index
      %16 = vector.load %arg5[%c1, %c0_12] : memref<2x1024xf32, #tpu.memory_space<vmem>>, vector<1x1024xf32>
      %c1_13 = arith.constant 1 : index
      %c5_14 = arith.constant 5 : index
      %17 = vector.load %arg3[%c1_13, %c5_14] : memref<2x8xf32, #tpu.memory_space<vmem>>, vector<1x1xf32>
      %18 = vector.broadcast %17 : vector<1x1xf32> to vector<1x1024xf32>
      %19 = arith.addf %16, %18 : vector<1x1024xf32>
      %c0_15 = arith.constant 0 : index
      %c0_16 = arith.constant 0 : index
      %20 = vector.load %arg3[%c0_15, %c0_16] : memref<2x8xf32, #tpu.memory_space<vmem>>, vector<1x1xf32>
      %c0_17 = arith.constant 0 : index
      %c1_18 = arith.constant 1 : index
      %21 = vector.load %arg3[%c0_17, %c1_18] : memref<2x8xf32, #tpu.memory_space<vmem>>, vector<1x1xf32>
      %cst_19 = arith.constant dense<0.000000e+00> : vector<1xf32>
      %22 = vector.multi_reduction <add>, %15, %cst_19 [1] : vector<1x1024xf32> to vector<1xf32>
      %23 = vector.shape_cast %22 : vector<1xf32> to vector<1x1xf32>
      %cst_20 = arith.constant 1.024000e+03 : f32
      %24 = vector.broadcast %cst_20 : f32 to vector<1x1xf32>
      %25 = arith.divf %23, %24 : vector<1x1xf32>
      %26 = vector.broadcast %25 : vector<1x1xf32> to vector<1x1024xf32>
      %27 = arith.subf %15, %26 : vector<1x1024xf32>
      %28 = arith.mulf %27, %27 : vector<1x1024xf32>
      %cst_21 = arith.constant dense<0.000000e+00> : vector<1xf32>
      %29 = vector.multi_reduction <add>, %28, %cst_21 [1] : vector<1x1024xf32> to vector<1xf32>
      %30 = vector.shape_cast %29 : vector<1xf32> to vector<1x1xf32>
      %cst_22 = arith.constant 1.024000e+03 : f32
      %31 = vector.broadcast %cst_22 : f32 to vector<1x1xf32>
      %32 = arith.divf %30, %31 : vector<1x1xf32>
      %33 = vector.broadcast %25 : vector<1x1xf32> to vector<1x1024xf32>
      %34 = arith.subf %15, %33 : vector<1x1024xf32>
      %cst_23 = arith.constant 9.99999974E-6 : f32
      %35 = vector.broadcast %cst_23 : f32 to vector<1x1xf32>
      %36 = arith.addf %32, %35 : vector<1x1xf32>
      %37 = math.rsqrt %36 : vector<1x1xf32>
      %38 = vector.broadcast %37 : vector<1x1xf32> to vector<1x1024xf32>
      %39 = arith.mulf %34, %38 : vector<1x1024xf32>
      %40 = vector.broadcast %20 : vector<1x1xf32> to vector<1x1024xf32>
      %41 = arith.mulf %39, %40 : vector<1x1024xf32>
      %42 = vector.broadcast %21 : vector<1x1xf32> to vector<1x1024xf32>
      %43 = arith.addf %41, %42 : vector<1x1024xf32>
      %cst_24 = arith.constant 0.000000e+00 : f32
      %44 = vector.broadcast %cst_24 : f32 to vector<1x1024xf32>
      %45 = arith.maximumf %43, %44 : vector<1x1024xf32>
      %c1_25 = arith.constant 1 : index
      %c0_26 = arith.constant 0 : index
      %46 = vector.load %arg3[%c1_25, %c0_26] : memref<2x8xf32, #tpu.memory_space<vmem>>, vector<1x1xf32>
      %c1_27 = arith.constant 1 : index
      %c1_28 = arith.constant 1 : index
      %47 = vector.load %arg3[%c1_27, %c1_28] : memref<2x8xf32, #tpu.memory_space<vmem>>, vector<1x1xf32>
      %cst_29 = arith.constant dense<0.000000e+00> : vector<1xf32>
      %48 = vector.multi_reduction <add>, %19, %cst_29 [1] : vector<1x1024xf32> to vector<1xf32>
      %49 = vector.shape_cast %48 : vector<1xf32> to vector<1x1xf32>
      %cst_30 = arith.constant 1.024000e+03 : f32
      %50 = vector.broadcast %cst_30 : f32 to vector<1x1xf32>
      %51 = arith.divf %49, %50 : vector<1x1xf32>
      %52 = vector.broadcast %51 : vector<1x1xf32> to vector<1x1024xf32>
      %53 = arith.subf %19, %52 : vector<1x1024xf32>
      %54 = arith.mulf %53, %53 : vector<1x1024xf32>
      %cst_31 = arith.constant dense<0.000000e+00> : vector<1xf32>
      %55 = vector.multi_reduction <add>, %54, %cst_31 [1] : vector<1x1024xf32> to vector<1xf32>
      %56 = vector.shape_cast %55 : vector<1xf32> to vector<1x1xf32>
      %cst_32 = arith.constant 1.024000e+03 : f32
      %57 = vector.broadcast %cst_32 : f32 to vector<1x1xf32>
      %58 = arith.divf %56, %57 : vector<1x1xf32>
      %59 = vector.broadcast %51 : vector<1x1xf32> to vector<1x1024xf32>
      %60 = arith.subf %19, %59 : vector<1x1024xf32>
      %cst_33 = arith.constant 9.99999974E-6 : f32
      %61 = vector.broadcast %cst_33 : f32 to vector<1x1xf32>
      %62 = arith.addf %58, %61 : vector<1x1xf32>
      %63 = math.rsqrt %62 : vector<1x1xf32>
      %64 = vector.broadcast %63 : vector<1x1xf32> to vector<1x1024xf32>
      %65 = arith.mulf %60, %64 : vector<1x1024xf32>
      %66 = vector.broadcast %46 : vector<1x1xf32> to vector<1x1024xf32>
      %67 = arith.mulf %65, %66 : vector<1x1024xf32>
      %68 = vector.broadcast %47 : vector<1x1xf32> to vector<1x1024xf32>
      %69 = arith.addf %67, %68 : vector<1x1024xf32>
      %cst_34 = arith.constant 0.000000e+00 : f32
      %70 = vector.broadcast %cst_34 : f32 to vector<1x1024xf32>
      %71 = arith.maximumf %69, %70 : vector<1x1024xf32>
      %c0_35 = arith.constant 0 : index
      %c2 = arith.constant 2 : index
      %72 = vector.load %arg3[%c0_35, %c2] : memref<2x8xf32, #tpu.memory_space<vmem>>, vector<1x1xf32>
      %73 = vector.broadcast %72 : vector<1x1xf32> to vector<1x1024xf32>
      %74 = arith.mulf %73, %45 : vector<1x1024xf32>
      %c0_36 = arith.constant 0 : index
      %c3 = arith.constant 3 : index
      %75 = vector.load %arg3[%c0_36, %c3] : memref<2x8xf32, #tpu.memory_space<vmem>>, vector<1x1xf32>
      %76 = vector.broadcast %75 : vector<1x1xf32> to vector<1x1024xf32>
      %77 = arith.mulf %76, %71 : vector<1x1024xf32>
      %78 = arith.addf %74, %77 : vector<1x1024xf32>
      %c0_37 = arith.constant 0 : index
      %c4 = arith.constant 4 : index
      %79 = vector.load %arg3[%c0_37, %c4] : memref<2x8xf32, #tpu.memory_space<vmem>>, vector<1x1xf32>
      %80 = vector.broadcast %79 : vector<1x1xf32> to vector<1x1024xf32>
      %81 = arith.addf %78, %80 : vector<1x1024xf32>
      %c1_38 = arith.constant 1 : index
      %c2_39 = arith.constant 2 : index
      %82 = vector.load %arg3[%c1_38, %c2_39] : memref<2x8xf32, #tpu.memory_space<vmem>>, vector<1x1xf32>
      %83 = vector.broadcast %82 : vector<1x1xf32> to vector<1x1024xf32>
      %84 = arith.mulf %83, %45 : vector<1x1024xf32>
      %c1_40 = arith.constant 1 : index
      %c3_41 = arith.constant 3 : index
      %85 = vector.load %arg3[%c1_40, %c3_41] : memref<2x8xf32, #tpu.memory_space<vmem>>, vector<1x1xf32>
      %86 = vector.broadcast %85 : vector<1x1xf32> to vector<1x1024xf32>
      %87 = arith.mulf %86, %71 : vector<1x1024xf32>
      %88 = arith.addf %84, %87 : vector<1x1024xf32>
      %c1_42 = arith.constant 1 : index
      %c4_43 = arith.constant 4 : index
      %89 = vector.load %arg3[%c1_42, %c4_43] : memref<2x8xf32, #tpu.memory_space<vmem>>, vector<1x1xf32>
      %90 = vector.broadcast %89 : vector<1x1xf32> to vector<1x1024xf32>
      %91 = arith.addf %88, %90 : vector<1x1024xf32>
      %92 = arith.maximumf %81, %91 : vector<1x1024xf32>
      %93 = arith.subf %81, %92 : vector<1x1024xf32>
      %94 = math.exp %93 : vector<1x1024xf32>
      %95 = arith.subf %91, %92 : vector<1x1024xf32>
      %96 = math.exp %95 : vector<1x1024xf32>
      %97 = arith.addf %94, %96 : vector<1x1024xf32>
      %cst_44 = arith.constant 1.000000e+00 : f32
      %98 = vector.broadcast %cst_44 : f32 to vector<1x1024xf32>
      %99 = arith.divf %98, %97 : vector<1x1024xf32>
      %100 = arith.mulf %94, %99 : vector<1x1024xf32>
      %c0_45 = arith.constant 0 : index
      %c0_46 = arith.constant 0 : index
      %101 = vector.load %arg4[%c0_45, %c0_46] : memref<2x1024xf32, #tpu.memory_space<vmem>>, vector<1x1024xf32>
      tpu.vector_store %arg4[%c0_45, %c0_46], %100 {strides = array<i32>} : memref<2x1024xf32, #tpu.memory_space<vmem>>, vector<1x1024xf32>,
      %102 = arith.mulf %96, %99 : vector<1x1024xf32>
      %c1_47 = arith.constant 1 : index
      %c0_48 = arith.constant 0 : index
      %103 = vector.load %arg4[%c1_47, %c0_48] : memref<2x1024xf32, #tpu.memory_space<vmem>>, vector<1x1024xf32>
      tpu.vector_store %arg4[%c1_47, %c0_48], %102 {strides = array<i32>} : memref<2x1024xf32, #tpu.memory_space<vmem>>, vector<1x1024xf32>,
    } else {
    }
    return
  }
  func.func @transform_0(%arg0: i32) -> (i32, i32) {
    %c0_i32 = arith.constant 0 : i32
    %c0_i32_0 = arith.constant 0 : i32
    return %c0_i32, %arg0 : i32, i32
  }
  func.func @transform_1(%arg0: i32) -> (i32, i32) {
    %c0_i32 = arith.constant 0 : i32
    %c0_i32_0 = arith.constant 0 : i32
    return %arg0, %c0_i32 : i32, i32
  }
  func.func @transform_2(%arg0: i32) -> (i32, i32) {
    %c0_i32 = arith.constant 0 : i32
    %c0_i32_0 = arith.constant 0 : i32
    %c0_i32_1 = arith.constant 0 : i32
    return %c0_i32, %c0_i32_0 : i32, i32
  }
  func.func @transform_3(%arg0: i32) -> (i32, i32) {
    %c0_i32 = arith.constant 0 : i32
    %c0_i32_0 = arith.constant 0 : i32
    %c0_i32_1 = arith.constant 0 : i32
    return %c0_i32, %c0_i32_0 : i32, i32
  }
}

</mosaic_0001>

<llo_original>
// kernel: artinet_forward.3
$region0: #{artinet_forward.3}
  #allocation0 [shape = 'u32[]', space=smem, size = 0x4, offset = 0x4, fixed_abs, tag = 'smem constant byte address 0x4 - core index']
  #allocation1 [shape = 'u32[144,128]{1,0:T(1,128)}', space=vmem, size = 0x12000, scoped, tag = 'internal scratch']
  %s0 = inlined_call_operand.vmem [shape: bf16[16,27], index: 0, kind: input, shape index: {}]
  %s1 = inlined_call_operand.vmem [shape: bf16[27,128], index: 1, kind: input, shape index: {}]
  %s2 = inlined_call_operand.vmem [shape: bf16[16,128], index: 2, kind: output, shape index: {}]
  %s3 = sld [smem:[#allocation0]]
  $region18: #{artinet_forward.3} parent=0
    _
  %s5 = ssub.s32 1, %s3
  %s6 = scalar_select 0, %s5, %s3
  // Predicated region
  $region2: #{artinet_forward.3} parent=0 // pred_check
    _
  $region3: #{artinet_forward.3} parent=0 // pred_check_branch
    %8 = sbr.rel (0) target = $region5
  $region4: #{artinet_forward.3} parent=0 // pred_region
    _
  $region5: #{artinet_forward.3} parent=0 // pred_fallthru
    _
  // Predicated region
  $region6: #{artinet_forward.3} parent=0 // pred_check
    _
  $region7: #{artinet_forward.3} parent=0 // pred_check_branch
    %10 = sbr.rel (0) target = $region9
  $region8: #{artinet_forward.3} parent=0 // pred_region
    _
  $region9: #{artinet_forward.3} parent=0 // pred_fallthru
    _
  %v12 = vld [vmem:[%s0] sm:$0xf]
  %v13 = vld [vmem:[%s0 + $0x4] sm:$0xf]
  %v14 = vld [vmem:[%s1] sm:$0xf]
  %v15 = vld [vmem:[%s1 + $0x4] sm:$0xf]
  %v16 = vld [vmem:[%s1 + $0x8] sm:$0xf]
  %v17 = vld [vmem:[%s1 + $0xc] sm:$0x3]
  %v20 = vunpack.c.l.b16 %v12
  %v21 = vunpack.c.l.b16 %v13
  %v22 = vpack.c.b16 %v21, %v20
  %v27 = vunpack.c.l.b16 %v14
  %v28 = vunpack.c.l.b16 %v15
  %v29 = vunpack.c.l.b16 %v16
  %v30 = vunpack.c.l.b16 %v17
  %v31 = vpack.c.b16 %v28, %v27
  %v32 = vpack.c.b16 %v30, %v29
  %vm34 = vcmask 220160
  %v36 = vsel %vm34, %v22, 0
  %vm38 = vcmask 1044480
  %vm39 = vcmask 1045504
  %v40 = vsel %vm38, 4294967295, 65535
  %v41 = vsel %vm39, %v40, 0
  %v43 = vand.u32 %v32, %v41
  %45 = vmatprep.subr.bf16.mxu0 0
  %46 = vmatpush1.bf16.msra.mxu0 %v31
  %47 = vmatprep.subr.bf16.mxu0 0
  %48 = vmatpush1.bf16.msra.mxu0 %v43
  %49 = vmatprep.subr.bf16.mxu0 0
  %50 = vmatpush1.bf16.msra.mxu0 0
  %51 = vmatprep.subr.bf16.mxu0 0
  %52 = vmatpush1.bf16.msra.mxu0 0
  %53 = vmatprep.subr.bf16.mxu0 0
  %54 = vmatpush1.bf16.msra.mxu0 0
  %55 = vmatprep.subr.bf16.mxu0 0
  %56 = vmatpush1.bf16.msra.mxu0 0
  %57 = vmatprep.subr.bf16.mxu0 0
  %58 = vmatpush1.bf16.msra.mxu0 0
  %59 = vmatprep.subr.bf16.mxu0 0
  %60 = vmatpush1.bf16.msra.mxu0 0
  %61 = vmatprep.subr.bf16.mxu0 0
  %62 = vmatpush1.bf16.msra.mxu0 0
  %63 = vmatprep.subr.bf16.mxu0 0
  %64 = vmatpush1.bf16.msra.mxu0 0
  %65 = vmatprep.subr.bf16.mxu0 0
  %66 = vmatpush1.bf16.msra.mxu0 0
  %67 = vmatprep.subr.bf16.mxu0 0
  %68 = vmatpush1.bf16.msra.mxu0 0
  %69 = vmatprep.subr.bf16.mxu0 0
  %70 = vmatpush1.bf16.msra.mxu0 0
  %71 = vmatprep.subr.bf16.mxu0 0
  %72 = vmatpush1.bf16.msra.mxu0 0
  %73 = vmatprep.subr.bf16.mxu0 0
  %74 = vmatpush1.bf16.msra.mxu0 0
  %75 = vmatprep.subr.bf16.mxu0 0
  %76 = vmatpush1.bf16.msra.mxu0 0
  %77 = vmatprep.mubr.bf16.mxu0 0
  %78 = vmatmul.mubr.bf16.gmra.mrb[0].mxu0 %v36
  %v79 = vpop.f32.mrb[0].mxu0
  %v80 = vadd.f32 0.0, %v79
  %v81 = vpop.f32.mrb[0].mxu0
  %v82 = vpop.f32.mrb[0].mxu0
  %v83 = vadd.f32 0.0, %v82
  %v84 = vpop.f32.mrb[0].mxu0
  %85 = vdwg.mxu0
  %v86 = vpack.c.bf16 %v83, %v80
  %v88 = vunpack.c.l.b16 %v86
  %v89 = vunpack.c.h.b16 %v86
  %v90 = vpack.c.b16 %v88, %v88
  %v91 = vpack.c.b16 %v89, %v89
  %94 = vst [vmem:[%s2] sm:$0xf] %v90
  %95 = vst [vmem:[%s2 + $0x4] sm:$0xf] %v91
  // Predicated region
  $region10: #{artinet_forward.3} parent=0 // pred_check
    _
  $region11: #{artinet_forward.3} parent=0 // pred_check_branch
    %97 = sbr.rel (0) target = $region13
  $region12: #{artinet_forward.3} parent=0 // pred_region
    _
  $region13: #{artinet_forward.3} parent=0 // pred_fallthru
    _
  // Predicated region
  $region14: #{artinet_forward.3} parent=0 // pred_check
    _
  $region15: #{artinet_forward.3} parent=0 // pred_check_branch
    %99 = sbr.rel (0) target = $region17
  $region16: #{artinet_forward.3} parent=0 // pred_region
    _
  $region17: #{artinet_forward.3} parent=0 // pred_fallthru
    _

// kernel: artinet_forward.4
$region0: #{artinet_forward.4}
  #allocation0 [shape = 'u32[]', space=smem, size = 0x4, offset = 0x4, fixed_abs, tag = 'smem constant byte address 0x4 - core index']
  #allocation1 [shape = 'u32[144,128]{1,0:T(1,128)}', space=vmem, size = 0x12000, scoped, tag = 'internal scratch']
  %s0 = inlined_call_operand.vmem [shape: bf16[16,432], index: 0, kind: input, shape index: {}]
  %s1 = inlined_call_operand.vmem [shape: bf16[432,128], index: 1, kind: input, shape index: {}]
  %s2 = inlined_call_operand.vmem [shape: bf16[64,16], index: 2, kind: input, shape index: {}]
  %s3 = inlined_call_operand.vmem [shape: f32[64,1], index: 3, kind: input, shape index: {}]
  %s4 = inlined_call_operand.vmem [shape: bf16[64,128], index: 4, kind: output, shape index: {}]
  %s5 = sld [smem:[#allocation0]]
  $region26: #{artinet_forward.4} parent=0
    _
  %s7 = ssub.s32 1, %s5
  %s8 = scalar_select 0, %s7, %s5
  // Predicated region
  $region2: #{artinet_forward.4} parent=0 // pred_check
    _
  $region3: #{artinet_forward.4} parent=0 // pred_check_branch
    %10 = sbr.rel (0) target = $region5
  $region4: #{artinet_forward.4} parent=0 // pred_region
    _
  $region5: #{artinet_forward.4} parent=0 // pred_fallthru
    _
  // Predicated region
  $region6: #{artinet_forward.4} parent=0 // pred_check
    _
  $region7: #{artinet_forward.4} parent=0 // pred_check_branch
    %12 = sbr.rel (0) target = $region9
  $region8: #{artinet_forward.4} parent=0 // pred_region
    _
  $region9: #{artinet_forward.4} parent=0 // pred_fallthru
    _
  // Predicated region
  $region10: #{artinet_forward.4} parent=0 // pred_check
    _
  $region11: #{artinet_forward.4} parent=0 // pred_check_branch
    %14 = sbr.rel (0) target = $region13
  $region12: #{artinet_forward.4} parent=0 // pred_region
    _
  $region13: #{artinet_forward.4} parent=0 // pred_fallthru
    _
  // Predicated region
  $region14: #{artinet_forward.4} parent=0 // pred_check
    _
  $region15: #{artinet_forward.4} parent=0 // pred_check_branch
    %16 = sbr.rel (0) target = $region17
  $region16: #{artinet_forward.4} parent=0 // pred_region
    _
  $region17: #{artinet_forward.4} parent=0 // pred_fallthru
    _
  %v18 = vld [vmem:[%s0] sm:$0xff]
  %v19 = vld [vmem:[%s0 + $0x8] sm:$0xff]
  %v20 = vld [vmem:[%s0 + $0x10] sm:$0xff]
  %v21 = vld [vmem:[%s0 + $0x18] sm:$0xff]
  %v22 = vld [vmem:[%s1] sm:$0xf]
  %v23 = vld [vmem:[%s1 + $0x4] sm:$0xf]
  %v24 = vld [vmem:[%s1 + $0x8] sm:$0xf]
  %v25 = vld [vmem:[%s1 + $0xc] sm:$0xf]
  %v26 = vld [vmem:[%s1 + $0x10] sm:$0xf]
  %v27 = vld [vmem:[%s1 + $0x14] sm:$0xf]
  %v28 = vld [vmem:[%s1 + $0x18] sm:$0xf]
  %v29 = vld [vmem:[%s1 + $0x1c] sm:$0xf]
  %v30 = vld [vmem:[%s1 + $0x20] sm:$0xf]
  %v31 = vld [vmem:[%s1 + $0x24] sm:$0xf]
  %v32 = vld [vmem:[%s1 + $0x28] sm:$0xf]
  %v33 = vld [vmem:[%s1 + $0x2c] sm:$0xf]
  %v34 = vld [vmem:[%s1 + $0x30] sm:$0xf]
  %v35 = vld [vmem:[%s1 + $0x34] sm:$0xf]
  %v36 = vld [vmem:[%s1 + $0x38] sm:$0xf]
  %v37 = vld [vmem:[%s1 + $0x3c] sm:$0xf]
  %v38 = vld [vmem:[%s1 + $0x40] sm:$0xf]
  %v39 = vld [vmem:[%s1 + $0x44] sm:$0xf]
  %v40 = vld [vmem:[%s1 + $0x48] sm:$0xf]
  %v41 = vld [vmem:[%s1 + $0x4c] sm:$0xf]
  %v42 = vld [vmem:[%s1 + $0x50] sm:$0xf]
  %v43 = vld [vmem:[%s1 + $0x54] sm:$0xf]
  %v44 = vld [vmem:[%s1 + $0x58] sm:$0xf]
  %v45 = vld [vmem:[%s1 + $0x5c] sm:$0xf]
  %v46 = vld [vmem:[%s1 + $0x60] sm:$0xf]
  %v47 = vld [vmem:[%s1 + $0x64] sm:$0xf]
  %v48 = vld [vmem:[%s1 + $0x68] sm:$0xf]
  %v49 = vld [vmem:[%s1 + $0x6c] sm:$0xf]
  %v50 = vld [vmem:[%s1 + $0x70] sm:$0xf]
  %v51 = vld [vmem:[%s1 + $0x74] sm:$0xf]
  %v52 = vld [vmem:[%s1 + $0x78] sm:$0xf]
  %v53 = vld [vmem:[%s1 + $0x7c] sm:$0xf]
  %v54 = vld [vmem:[%s1 + $0x80] sm:$0xf]
  %v55 = vld [vmem:[%s1 + $0x84] sm:$0xf]
  %v56 = vld [vmem:[%s1 + $0x88] sm:$0xf]
  %v57 = vld [vmem:[%s1 + $0x8c] sm:$0xf]
  %v58 = vld [vmem:[%s1 + $0x90] sm:$0xf]
  %v59 = vld [vmem:[%s1 + $0x94] sm:$0xf]
  %v60 = vld [vmem:[%s1 + $0x98] sm:$0xf]
  %v61 = vld [vmem:[%s1 + $0x9c] sm:$0xf]
  %v62 = vld [vmem:[%s1 + $0xa0] sm:$0xf]
  %v63 = vld [vmem:[%s1 + $0xa4] sm:$0xf]
  %v64 = vld [vmem:[%s1 + $0xa8] sm:$0xf]
  %v65 = vld [vmem:[%s1 + $0xac] sm:$0xf]
  %v66 = vld [vmem:[%s1 + $0xb0] sm:$0xf]
  %v67 = vld [vmem:[%s1 + $0xb4] sm:$0xf]
  %v68 = vld [vmem:[%s1 + $0xb8] sm:$0xf]
  %v69 = vld [vmem:[%s1 + $0xbc] sm:$0xf]
  %v70 = vld [vmem:[%s1 + $0xc0] sm:$0xf]
  %v71 = vld [vmem:[%s1 + $0xc4] sm:$0xf]
  %v72 = vld [vmem:[%s1 + $0xc8] sm:$0xf]
  %v73 = vld [vmem:[%s1 + $0xcc] sm:$0xf]
  %v74 = vld [vmem:[%s1 + $0xd0] sm:$0xf]
  %v75 = vld [vmem:[%s1 + $0xd4] sm:$0xf]
  %v80 = vunpack.c.l.b16 %v18
  %v81 = vunpack.c.h.b16 %v18
  %v82 = vunpack.c.l.b16 %v19
  %v83 = vunpack.c.h.b16 %v19
  %v84 = vunpack.c.l.b16 %v20
  %v85 = vunpack.c.h.b16 %v20
  %v86 = vunpack.c.l.b16 %v21
  %v87 = vunpack.c.h.b16 %v21
  %v88 = vpack.c.b16 %v84, %v80
  %v89 = vpack.c.b16 %v85, %v81
  %v90 = vpack.c.b16 %v86, %v82
  %v91 = vpack.c.b16 %v87, %v83
  %v149 = vunpack.c.l.b16 %v22
  %v150 = vunpack.c.l.b16 %v23
  %v151 = vunpack.c.l.b16 %v24
  %v152 = vunpack.c.l.b16 %v25
  %v153 = vunpack.c.l.b16 %v26
  %v154 = vunpack.c.l.b16 %v27
  %v155 = vunpack.c.l.b16 %v28
  %v156 = vunpack.c.l.b16 %v29
  %v157 = vunpack.c.l.b16 %v30
  %v158 = vunpack.c.l.b16 %v31
  %v159 = vunpack.c.l.b16 %v32
  %v160 = vunpack.c.l.b16 %v33
  %v161 = vunpack.c.l.b16 %v34
  %v162 = vunpack.c.l.b16 %v35
  %v163 = vunpack.c.l.b16 %v36
  %v164 = vunpack.c.l.b16 %v37
  %v165 = vunpack.c.l.b16 %v38
  %v166 = vunpack.c.l.b16 %v39
  %v167 = vunpack.c.l.b16 %v40
  %v168 = vunpack.c.l.b16 %v41
  %v169 = vunpack.c.l.b16 %v42
  %v170 = vunpack.c.l.b16 %v43
  %v171 = vunpack.c.l.b16 %v44
  %v172 = vunpack.c.l.b16 %v45
  %v173 = vunpack.c.l.b16 %v46
  %v174 = vunpack.c.l.b16 %v47
  %v175 = vunpack.c.l.b16 %v48
  %v176 = vunpack.c.l.b16 %v49
  %v177 = vunpack.c.l.b16 %v50
  %v178 = vunpack.c.l.b16 %v51
  %v179 = vunpack.c.l.b16 %v52
  %v180 = vunpack.c.l.b16 %v53
  %v181 = vunpack.c.l.b16 %v54
  %v182 = vunpack.c.l.b16 %v55
  %v183 = vunpack.c.l.b16 %v56
  %v184 = vunpack.c.l.b16 %v57
  %v185 = vunpack.c.l.b16 %v58
  %v186 = vunpack.c.l.b16 %v59
  %v187 = vunpack.c.l.b16 %v60
  %v188 = vunpack.c.l.b16 %v61
  %v189 = vunpack.c.l.b16 %v62
  %v190 = vunpack.c.l.b16 %v63
  %v191 = vunpack.c.l.b16 %v64
  %v192 = vunpack.c.l.b16 %v65
  %v193 = vunpack.c.l.b16 %v66
  %v194 = vunpack.c.l.b16 %v67
  %v195 = vunpack.c.l.b16 %v68
  %v196 = vunpack.c.l.b16 %v69
  %v197 = vunpack.c.l.b16 %v70
  %v198 = vunpack.c.l.b16 %v71
  %v199 = vunpack.c.l.b16 %v72
  %v200 = vunpack.c.l.b16 %v73
  %v201 = vunpack.c.l.b16 %v74
  %v202 = vunpack.c.l.b16 %v75
  %v203 = vpack.c.b16 %v150, %v149
  %v204 = vpack.c.b16 %v152, %v151
  %v205 = vpack.c.b16 %v154, %v153
  %v206 = vpack.c.b16 %v156, %v155
  %v207 = vpack.c.b16 %v158, %v157
  %v208 = vpack.c.b16 %v160, %v159
  %v209 = vpack.c.b16 %v162, %v161
  %v210 = vpack.c.b16 %v164, %v163
  %v211 = vpack.c.b16 %v166, %v165
  %v212 = vpack.c.b16 %v168, %v167
  %v213 = vpack.c.b16 %v170, %v169
  %v214 = vpack.c.b16 %v172, %v171
  %v215 = vpack.c.b16 %v174, %v173
  %v216 = vpack.c.b16 %v176, %v175
  %v217 = vpack.c.b16 %v178, %v177
  %v218 = vpack.c.b16 %v180, %v179
  %v219 = vpack.c.b16 %v182, %v181
  %v220 = vpack.c.b16 %v184, %v183
  %v221 = vpack.c.b16 %v186, %v185
  %v222 = vpack.c.b16 %v188, %v187
  %v223 = vpack.c.b16 %v190, %v189
  %v224 = vpack.c.b16 %v192, %v191
  %v225 = vpack.c.b16 %v194, %v193
  %v226 = vpack.c.b16 %v196, %v195
  %v227 = vpack.c.b16 %v198, %v197
  %v228 = vpack.c.b16 %v200, %v199
  %v229 = vpack.c.b16 %v202, %v201
  %vm257 = vcmask 392192
  %v259 = vsel %vm257, %v91, 0
  %261 = vmatprep.subr.bf16.mxu0 0
  %262 = vmatpush1.bf16.msra.mxu0 %v203
  %263 = vmatprep.subr.bf16.mxu0 0
  %264 = vmatpush1.bf16.msra.mxu0 %v204
  %265 = vmatprep.subr.bf16.mxu0 0
  %266 = vmatpush1.bf16.msra.mxu0 %v205
  %267 = vmatprep.subr.bf16.mxu0 0
  %268 = vmatpush1.bf16.msra.mxu0 %v206
  %269 = vmatprep.subr.bf16.mxu0 0
  %270 = vmatpush1.bf16.msra.mxu0 %v207
  %271 = vmatprep.subr.bf16.mxu0 0
  %272 = vmatpush1.bf16.msra.mxu0 %v208
  %273 = vmatprep.subr.bf16.mxu0 0
  %274 = vmatpush1.bf16.msra.mxu0 %v209
  %275 = vmatprep.subr.bf16.mxu0 0
  %276 = vmatpush1.bf16.msra.mxu0 %v210
  %277 = vmatprep.subr.bf16.mxu0 0
  %278 = vmatpush1.bf16.msra.mxu0 %v211
  %279 = vmatprep.subr.bf16.mxu0 0
  %280 = vmatpush1.bf16.msra.mxu0 %v212
  %281 = vmatprep.subr.bf16.mxu0 0
  %282 = vmatpush1.bf16.msra.mxu0 %v213
  %283 = vmatprep.subr.bf16.mxu0 0
  %284 = vmatpush1.bf16.msra.mxu0 %v214
  %285 = vmatprep.subr.bf16.mxu0 0
  %286 = vmatpush1.bf16.msra.mxu0 %v215
  %287 = vmatprep.subr.bf16.mxu0 0
  %288 = vmatpush1.bf16.msra.mxu0 %v216
  %289 = vmatprep.subr.bf16.mxu0 0
  %290 = vmatpush1.bf16.msra.mxu0 %v217
  %291 = vmatprep.subr.bf16.mxu0 0
  %292 = vmatpush1.bf16.msra.mxu0 %v218
  %293 = vmatprep.mubr.bf16.mxu0 %v89
  %294 = vmatmul.mubr.bf16.gmra.mrb[0].mxu0 %v88
  %v295 = vpop.f32.mrb[0].mxu0
  %v296 = vadd.f32 0.0, %v295
  %v297 = vpop.f32.mrb[0].mxu0
  %v298 = vpop.f32.mrb[0].mxu0
  %v299 = vadd.f32 0.0, %v298
  %v300 = vpop.f32.mrb[0].mxu0
  %301 = vdwg.mxu0
  %302 = vmatprep.subr.bf16.mxu0 0
  %303 = vmatpush1.bf16.msra.mxu0 %v219
  %304 = vmatprep.subr.bf16.mxu0 0
  %305 = vmatpush1.bf16.msra.mxu0 %v220
  %306 = vmatprep.subr.bf16.mxu0 0
  %307 = vmatpush1.bf16.msra.mxu0 %v221
  %308 = vmatprep.subr.bf16.mxu0 0
  %309 = vmatpush1.bf16.msra.mxu0 %v222
  %310 = vmatprep.subr.bf16.mxu0 0
  %311 = vmatpush1.bf16.msra.mxu0 %v223
  %312 = vmatprep.subr.bf16.mxu0 0
  %313 = vmatpush1.bf16.msra.mxu0 %v224
  %314 = vmatprep.subr.bf16.mxu0 0
  %315 = vmatpush1.bf16.msra.mxu0 %v225
  %316 = vmatprep.subr.bf16.mxu0 0
  %317 = vmatpush1.bf16.msra.mxu0 %v226
  %318 = vmatprep.subr.bf16.mxu0 0
  %319 = vmatpush1.bf16.msra.mxu0 %v227
  %320 = vmatprep.subr.bf16.mxu0 0
  %321 = vmatpush1.bf16.msra.mxu0 %v228
  %322 = vmatprep.subr.bf16.mxu0 0
  %323 = vmatpush1.bf16.msra.mxu0 %v229
  %324 = vmatprep.subr.bf16.mxu0 0
  %325 = vmatpush1.bf16.msra.mxu0 0
  %326 = vmatprep.subr.bf16.mxu0 0
  %327 = vmatpush1.bf16.msra.mxu0 0
  %328 = vmatprep.subr.bf16.mxu0 0
  %329 = vmatpush1.bf16.msra.mxu0 0
  %330 = vmatprep.subr.bf16.mxu0 0
  %331 = vmatpush1.bf16.msra.mxu0 0
  %332 = vmatprep.subr.bf16.mxu0 0
  %333 = vmatpush1.bf16.msra.mxu0 0
  %334 = vmatprep.mubr.bf16.mxu0 %v259
  %335 = vmatmul.mubr.bf16.gmra.mrb[0].mxu0 %v90
  %v336 = vpop.f32.mrb[0].mxu0
  %v337 = vadd.f32 %v296, %v336
  %v338 = vpop.f32.mrb[0].mxu0
  %v339 = vpop.f32.mrb[0].mxu0
  %v340 = vadd.f32 %v299, %v339
  %v341 = vpop.f32.mrb[0].mxu0
  %342 = vdwg.mxu0
  %v343 = vld [vmem:[%s2] sm:$0xf]
  %v344 = vld [vmem:[%s2 + $0x4] sm:$0xf]
  %v345 = vld [vmem:[%s2 + $0x8] sm:$0xf]
  %v346 = vld [vmem:[%s2 + $0xc] sm:$0xf]
  %v347 = vld [vmem:[%s2 + $0x10] sm:$0xf]
  %v348 = vld [vmem:[%s2 + $0x14] sm:$0xf]
  %v349 = vld [vmem:[%s2 + $0x18] sm:$0xf]
  %v350 = vld [vmem:[%s2 + $0x1c] sm:$0xf]
  %v351 = vpack.c.bf16 %v340, %v337
  %v352 = vld [vmem:[%s3] sm:$0xff]
  %v353 = vld [vmem:[%s3 + $0x8] sm:$0xff]
  %v354 = vld [vmem:[%s3 + $0x10] sm:$0xff]
  %v355 = vld [vmem:[%s3 + $0x18] sm:$0xff]
  %v356 = vld [vmem:[%s3 + $0x20] sm:$0xff]
  %v357 = vld [vmem:[%s3 + $0x28] sm:$0xff]
  %v358 = vld [vmem:[%s3 + $0x30] sm:$0xff]
  %v359 = vld [vmem:[%s3 + $0x38] sm:$0xff]
  %361 = vset.pattern.permute.xlu0 0
  %362 = vperm.xlu0 %361, %v352
  %v363 = vpop.permute.xlu0 %362
  %366 = vset.pattern.permute.xlu0 0
  %367 = vperm.xlu0 %366, %v353
  %v368 = vpop.permute.xlu0 %367
  %371 = vset.pattern.permute.xlu0 0
  %372 = vperm.xlu0 %371, %v354
  %v373 = vpop.permute.xlu0 %372
  %376 = vset.pattern.permute.xlu0 0
  %377 = vperm.xlu0 %376, %v355
  %v378 = vpop.permute.xlu0 %377
  %381 = vset.pattern.permute.xlu0 0
  %382 = vperm.xlu0 %381, %v356
  %v383 = vpop.permute.xlu0 %382
  %386 = vset.pattern.permute.xlu0 0
  %387 = vperm.xlu0 %386, %v357
  %v388 = vpop.permute.xlu0 %387
  %391 = vset.pattern.permute.xlu0 0
  %392 = vperm.xlu0 %391, %v358
  %v393 = vpop.permute.xlu0 %392
  %396 = vset.pattern.permute.xlu0 0
  %397 = vperm.xlu0 %396, %v359
  %v398 = vpop.permute.xlu0 %397
  %v408 = vunpack.c.l.b16 %v343
  %v409 = vunpack.c.l.b16 %v344
  %v410 = vunpack.c.l.b16 %v345
  %v411 = vunpack.c.l.b16 %v346
  %v412 = vunpack.c.l.b16 %v347
  %v413 = vunpack.c.l.b16 %v348
  %v414 = vunpack.c.l.b16 %v349
  %v415 = vunpack.c.l.b16 %v350
  %v416 = vpack.c.b16 %v409, %v408
  %v417 = vpack.c.b16 %v411, %v410
  %v418 = vpack.c.b16 %v413, %v412
  %v419 = vpack.c.b16 %v415, %v414
  %vm420 = vcmask 130048
  %v422 = vsel %vm420, %v416, 0
  %v425 = vsel %vm420, %v417, 0
  %v428 = vsel %vm420, %v418, 0
  %v431 = vsel %vm420, %v419, 0
  %433 = vmatprep.subr.bf16.mxu0 0
  %434 = vmatpush1.bf16.msra.mxu0 %v351
  %435 = vmatprep.subr.bf16.mxu0 0
  %436 = vmatpush1.bf16.msra.mxu0 0
  %437 = vmatprep.subr.bf16.mxu0 0
  %438 = vmatpush1.bf16.msra.mxu0 0
  %439 = vmatprep.subr.bf16.mxu0 0
  %440 = vmatpush1.bf16.msra.mxu0 0
  %441 = vmatprep.subr.bf16.mxu0 0
  %442 = vmatpush1.bf16.msra.mxu0 0
  %443 = vmatprep.subr.bf16.mxu0 0
  %444 = vmatpush1.bf16.msra.mxu0 0
  %445 = vmatprep.subr.bf16.mxu0 0
  %446 = vmatpush1.bf16.msra.mxu0 0
  %447 = vmatprep.subr.bf16.mxu0 0
  %448 = vmatpush1.bf16.msra.mxu0 0
  %449 = vmatprep.subr.bf16.mxu0 0
  %450 = vmatpush1.bf16.msra.mxu0 0
  %451 = vmatprep.subr.bf16.mxu0 0
  %452 = vmatpush1.bf16.msra.mxu0 0
  %453 = vmatprep.subr.bf16.mxu0 0
  %454 = vmatpush1.bf16.msra.mxu0 0
  %455 = vmatprep.subr.bf16.mxu0 0
  %456 = vmatpush1.bf16.msra.mxu0 0
  %457 = vmatprep.subr.bf16.mxu0 0
  %458 = vmatpush1.bf16.msra.mxu0 0
  %459 = vmatprep.subr.bf16.mxu0 0
  %460 = vmatpush1.bf16.msra.mxu0 0
  %461 = vmatprep.subr.bf16.mxu0 0
  %462 = vmatpush1.bf16.msra.mxu0 0
  %463 = vmatprep.subr.bf16.mxu0 0
  %464 = vmatpush1.bf16.msra.mxu0 0
  %465 = vmatprep.mubr.bf16.mxu0 0
  %466 = vmatmul.mubr.bf16.gmra.mrb[0].mxu0 %v422
  %v467 = vpop.f32.mrb[0].mxu0
  %v468 = vadd.f32 %v363, %v467
  %v469 = vpop.f32.mrb[0].mxu0
  %v470 = vpop.f32.mrb[0].mxu0
  %v471 = vadd.f32 %v368, %v470
  %v472 = vpop.f32.mrb[0].mxu0
  %473 = vmatprep.mubr.bf16.mxu0 0
  %474 = vmatmul.mubr.bf16.gmra.mrb[0].mxu0 %v425
  %v475 = vpop.f32.mrb[0].mxu0
  %v476 = vadd.f32 %v373, %v475
  %v477 = vpop.f32.mrb[0].mxu0
  %v478 = vpop.f32.mrb[0].mxu0
  %v479 = vadd.f32 %v378, %v478
  %v480 = vpop.f32.mrb[0].mxu0
  %481 = vmatprep.mubr.bf16.mxu0 0
  %482 = vmatmul.mubr.bf16.gmra.mrb[0].mxu0 %v428
  %v483 = vpop.f32.mrb[0].mxu0
  %v484 = vadd.f32 %v383, %v483
  %v485 = vpop.f32.mrb[0].mxu0
  %v486 = vpop.f32.mrb[0].mxu0
  %v487 = vadd.f32 %v388, %v486
  %v488 = vpop.f32.mrb[0].mxu0
  %489 = vmatprep.mubr.bf16.mxu0 0
  %490 = vmatmul.mubr.bf16.gmra.mrb[0].mxu0 %v431
  %v491 = vpop.f32.mrb[0].mxu0
  %v492 = vadd.f32 %v393, %v491
  %v493 = vpop.f32.mrb[0].mxu0
  %v494 = vpop.f32.mrb[0].mxu0
  %v495 = vadd.f32 %v398, %v494
  %v496 = vpop.f32.mrb[0].mxu0
  %497 = vdwg.mxu0
  %v498 = vpack.c.bf16 %v471, %v468
  %v499 = vpack.c.bf16 %v479, %v476
  %v500 = vpack.c.bf16 %v487, %v484
  %v501 = vpack.c.bf16 %v495, %v492
  %v506 = vunpack.c.l.b16 %v498
  %v507 = vunpack.c.h.b16 %v498
  %v508 = vunpack.c.l.b16 %v499
  %v509 = vunpack.c.h.b16 %v499
  %v510 = vunpack.c.l.b16 %v500
  %v511 = vunpack.c.h.b16 %v500
  %v512 = vunpack.c.l.b16 %v501
  %v513 = vunpack.c.h.b16 %v501
  %v514 = vpack.c.b16 %v506, %v506
  %v515 = vpack.c.b16 %v507, %v507
  %v516 = vpack.c.b16 %v508, %v508
  %v517 = vpack.c.b16 %v509, %v509
  %v518 = vpack.c.b16 %v510, %v510
  %v519 = vpack.c.b16 %v511, %v511
  %v520 = vpack.c.b16 %v512, %v512
  %v521 = vpack.c.b16 %v513, %v513
  %530 = vst [vmem:[%s4] sm:$0xf] %v514
  %531 = vst [vmem:[%s4 + $0x4] sm:$0xf] %v515
  %532 = vst [vmem:[%s4 + $0x8] sm:$0xf] %v516
  %533 = vst [vmem:[%s4 + $0xc] sm:$0xf] %v517
  %534 = vst [vmem:[%s4 + $0x10] sm:$0xf] %v518
  %535 = vst [vmem:[%s4 + $0x14] sm:$0xf] %v519
  %536 = vst [vmem:[%s4 + $0x18] sm:$0xf] %v520
  %537 = vst [vmem:[%s4 + $0x1c] sm:$0xf] %v521
  // Predicated region
  $region18: #{artinet_forward.4} parent=0 // pred_check
    _
  $region19: #{artinet_forward.4} parent=0 // pred_check_branch
    %539 = sbr.rel (0) target = $region21
  $region20: #{artinet_forward.4} parent=0 // pred_region
    _
  $region21: #{artinet_forward.4} parent=0 // pred_fallthru
    _
  // Predicated region
  $region22: #{artinet_forward.4} parent=0 // pred_check
    _
  $region23: #{artinet_forward.4} parent=0 // pred_check_branch
    %541 = sbr.rel (0) target = $region25
  $region24: #{artinet_forward.4} parent=0 // pred_region
    _
  $region25: #{artinet_forward.4} parent=0 // pred_fallthru
    _

// kernel: artinet_forward.5
$region0: #{artinet_forward.5}
  #allocation0 [shape = 'u32[]', space=smem, size = 0x4, offset = 0x4, fixed_abs, tag = 'smem constant byte address 0x4 - core index']
  #allocation1 [shape = 'u32[144,128]{1,0:T(1,128)}', space=vmem, size = 0x12000, scoped, tag = 'internal scratch']
  #allocation2 [shape = 'f32[2,1024]{1,0:T(2,128)}', space=vmem, size = 0x2000, scoped, tag = 'scratch operand']
  %s0 = inlined_call_operand.vmem [shape: bf16[2,1024], index: 0, kind: input, shape index: {}]
  %s1 = inlined_call_operand.vmem [shape: bf16[1024,1024], index: 1, kind: input, shape index: {}]
  %s2 = inlined_call_operand.vmem [shape: f32[2,8], index: 2, kind: input, shape index: {}]
  %s3 = inlined_call_operand.vmem [shape: f32[2,1024], index: 3, kind: output, shape index: {}]
  %s4 = sld [smem:[#allocation0]]
  $region53: #{artinet_forward.5} parent=0
    _
  %s6 = ssub.s32 1, %s4
  %s7 = scalar_select 0, %s6, %s4
  loop: start=0, step=1, limit=6
  $region2: #{artinet_forward.5} parent=0 // loop_pre_header
    _
  $region3: #{artinet_forward.5} parent=0 // loop_header
    %s9 = sphi 0, %s13
    %p10 = scmp.ge.s32.totalorder %s9, 6
    %s19 = sphi 0, %s21
    %s22 = sphi 0, %s19
    %s23 = sphi 0, %s22
    %s39 = sphi 0, %s23
    %s45 = sphi 0, %s47
    %s48 = sphi 0, %s45
    %s49 = sphi 0, %s48
    %s65 = sphi 0, %s49
    %s69 = sphi 0, %s69
    %s71 = sphi 0, %s69
    %s72 = sphi 0, %s71
    %s86 = sphi 0, %s72
    %s90 = sphi 0, %s90
    %s92 = sphi 0, %s90
    %s93 = sphi 0, %s92
    %s107 = sphi 0, %s93
  $region4: #{artinet_forward.5} parent=0 // loop_header_branch
    %12 = sbr.rel (%p10) target = $region8
  $region5: #{artinet_forward.5} parent=0 // loop_body
    %s14 = ssub.s32 %s9, 1
    %s15 = ssub.s32 %s9, 2
    %s16 = sadd.s32 %s9, 1
    %s17 = ssub.s32 %s9, %s16
    %p18 = scmp.eq.s32.totalorder %s17, 0
    %s20 = sadd.s32 %s19, 1
    %s21 = scalar_select %p18, %s19, %s20
    %p24 = pneg %p18
    %p25 = scmp.eq.s32.totalorder %s9, 3
    %p26 = por %p24, %p25
    %p27 = scmp.ne.s32.totalorder %s19, %s22
    %p28 = scmp.eq.s32.totalorder %s9, 0
    %p29 = por %p27, %p28
    %p30 = scmp.ne.s32.totalorder %s19, %s22
    %p31 = scmp.eq.s32.totalorder %s14, 3
    %p32 = por %p30, %p31
    %p33 = scmp.ne.s32.totalorder %s22, %s23
    %p34 = scmp.eq.s32.totalorder %s14, 0
    %p35 = por %p33, %p34
    %p36 = scmp.ne.s32.totalorder %s22, %s23
    %p37 = scmp.eq.s32.totalorder %s15, 3
    %p38 = por %p36, %p37
    %p40 = scmp.ne.s32.totalorder %s23, %s39
    %p41 = scmp.eq.s32.totalorder %s15, 0
    %p42 = por %p40, %p41
    %s43 = ssub.s32 %s9, %s16
    %p44 = scmp.eq.s32.totalorder %s43, 0
    %s46 = sadd.s32 %s45, 1
    %s47 = scalar_select %p44, %s45, %s46
    %p50 = pneg %p44
    %p51 = scmp.eq.s32.totalorder %s9, 3
    %p52 = por %p50, %p51
    %p53 = scmp.ne.s32.totalorder %s45, %s48
    %p54 = scmp.eq.s32.totalorder %s9, 0
    %p55 = por %p53, %p54
    %p56 = scmp.ne.s32.totalorder %s45, %s48
    %p57 = scmp.eq.s32.totalorder %s14, 3
    %p58 = por %p56, %p57
    %p59 = scmp.ne.s32.totalorder %s48, %s49
    %p60 = scmp.eq.s32.totalorder %s14, 0
    %p61 = por %p59, %p60
    %p62 = scmp.ne.s32.totalorder %s48, %s49
    %p63 = scmp.eq.s32.totalorder %s15, 3
    %p64 = por %p62, %p63
    %p66 = scmp.ne.s32.totalorder %s49, %s65
    %p67 = scmp.eq.s32.totalorder %s15, 0
    %p68 = por %p66, %p67
    %s70 = sadd.s32 %s69, 1
    %p73 = scmp.eq.s32.totalorder %s9, 3
    %p74 = scmp.ne.s32.totalorder %s69, %s71
    %p75 = scmp.eq.s32.totalorder %s9, 0
    %p76 = por %p74, %p75
    %p77 = scmp.ne.s32.totalorder %s69, %s71
    %p78 = scmp.eq.s32.totalorder %s14, 3
    %p79 = por %p77, %p78
    %p80 = scmp.ne.s32.totalorder %s71, %s72
    %p81 = scmp.eq.s32.totalorder %s14, 0
    %p82 = por %p80, %p81
    %p83 = scmp.ne.s32.totalorder %s71, %s72
    %p84 = scmp.eq.s32.totalorder %s15, 3
    %p85 = por %p83, %p84
    %p87 = scmp.ne.s32.totalorder %s72, %s86
    %p88 = scmp.eq.s32.totalorder %s15, 0
    %p89 = por %p87, %p88
    %s91 = sadd.s32 %s90, 1
    %p94 = scmp.eq.s32.totalorder %s9, 3
    %p95 = scmp.ne.s32.totalorder %s90, %s92
    %p96 = scmp.eq.s32.totalorder %s9, 0
    %p97 = por %p95, %p96
    %p98 = scmp.ne.s32.totalorder %s90, %s92
    %p99 = scmp.eq.s32.totalorder %s14, 3
    %p100 = por %p98, %p99
    %p101 = scmp.ne.s32.totalorder %s92, %s93
    %p102 = scmp.eq.s32.totalorder %s14, 0
    %p103 = por %p101, %p102
    %p104 = scmp.ne.s32.totalorder %s92, %s93
    %p105 = scmp.eq.s32.totalorder %s15, 3
    %p106 = por %p104, %p105
    %p108 = scmp.ne.s32.totalorder %s93, %s107
    %p109 = scmp.eq.s32.totalorder %s15, 0
    %p110 = por %p108, %p109
    %p111 = scmp.le.s32.totalorder 1, %s9
    %p112 = scmp.lt.s32.totalorder %s9, 5
    %p113 = pnand %p111, %p112
    %p114 = pneg %p113
    // Predicated region
    $region9: #{artinet_forward.5} parent=5 // pred_check
      _
    $region10: #{artinet_forward.5} parent=5 // pred_check_branch
      %116 = sbr.rel (%p113) target = $region12
    $region11: #{artinet_forward.5} parent=5 // pred_region
      %s117 = ssub.s32 %s9, 1
      // Predicated region
      $region13: #{artinet_forward.5} parent=11 // pred_check
        %p118 = pneg %p82
      $region14: #{artinet_forward.5} parent=11 // pred_check_branch
        %120 = sbr.rel (%p118) target = $region16
      $region15: #{artinet_forward.5} parent=11 // pred_region
        _
      $region16: #{artinet_forward.5} parent=11 // pred_fallthru
        _
    $region12: #{artinet_forward.5} parent=5 // pred_fallthru
      _
    %p121 = scmp.lt.s32.totalorder %s9, 4
    // Predicated region
    $region17: #{artinet_forward.5} parent=5 // pred_check
      %p122 = pneg %p121
    $region18: #{artinet_forward.5} parent=5 // pred_check_branch
      %124 = sbr.rel (%p122) target = $region20
    $region19: #{artinet_forward.5} parent=5 // pred_region
      // Predicated region
      $region21: #{artinet_forward.5} parent=19 // pred_check
        %p125 = pneg %p29
      $region22: #{artinet_forward.5} parent=19 // pred_check_branch
        %127 = sbr.rel (%p125) target = $region24
      $region23: #{artinet_forward.5} parent=19 // pred_region
        %s128 = smul.u32 2, %s9
        %p129 = scmp.lt.s32.totalorder %s128, 7
        %s130 = scalar_select %p129, %s128, 7
        %s131 = scalar_lea.vmem %s0, %s130
        %s132 = smul.u32 2, %s9
      $region24: #{artinet_forward.5} parent=19 // pred_fallthru
        _
      // Predicated region
      $region25: #{artinet_forward.5} parent=19 // pred_check
        %p133 = pneg %p55
      $region26: #{artinet_forward.5} parent=19 // pred_check_branch
        %135 = sbr.rel (%p133) target = $region28
      $region27: #{artinet_forward.5} parent=19 // pred_region
        %s136 = smul.u32 32, %s9
        %p137 = scmp.lt.s32.totalorder %s136, 127
        %s138 = scalar_select %p137, %s136, 127
        %s139 = smul.addr %s138, 8
        %s140 = smul.addr %s139, 4
        %s141 = scalar_lea.vmem %s1, %s140
        %s142 = smul.u32 32, %s9
      $region28: #{artinet_forward.5} parent=19 // pred_fallthru
        _
    $region20: #{artinet_forward.5} parent=5 // pred_fallthru
      _
    %p143 = scmp.le.s32.totalorder 1, %s9
    %p144 = scmp.lt.s32.totalorder %s9, 5
    %p145 = pnand %p143, %p144
    %p146 = pneg %p145
    // Predicated region
    $region29: #{artinet_forward.5} parent=5 // pred_check
      _
    $region30: #{artinet_forward.5} parent=5 // pred_check_branch
      %148 = sbr.rel (%p145) target = $region32
    $region31: #{artinet_forward.5} parent=5 // pred_region
      %s149 = ssub.s32 %s9, 1
      %s150 = smul.u32 2, %s14
      %p151 = scmp.lt.s32.totalorder %s150, 7
      %s152 = scalar_select %p151, %s150, 7
      %s153 = scalar_lea.vmem %s0, %s152
      %p154 = pneg %p35
      %p155 = pneg %p32
      %s156 = smul.u32 32, %s14
      %p157 = scmp.lt.s32.totalorder %s156, 127
      %s158 = scalar_select %p157, %s156, 127
      %s159 = smul.addr %s158, 8
      %s160 = smul.addr %s159, 4
      %s161 = scalar_lea.vmem %s1, %s160
      %p162 = pneg %p61
      %p163 = pneg %p58
      %p164 = pneg %p82
      %p165 = pneg %p79
      %p166 = pneg %p103
      %p167 = pneg %p100
      %s168 = smul.u32 2, %s14
      %p169 = scmp.lt.s32.totalorder %s168, 7
      %s170 = scalar_select %p169, %s168, 7
      %s171 = scalar_lea.vmem %s0, %s170
      %s172 = smul.u32 2, %s14
      %s173 = smul.u32 32, %s14
      %p174 = scmp.lt.s32.totalorder %s173, 127
      %s175 = scalar_select %p174, %s173, 127
      %s176 = smul.addr %s175, 8
      %s177 = smul.addr %s176, 4
      %s178 = scalar_lea.vmem %s1, %s177
      %s179 = smul.u32 32, %s14
      %p180 = scmp.eq.s32.totalorder %s14, 0
      // Predicated region
      $region33: #{artinet_forward.5} parent=31 // pred_check
        %p181 = pneg %p180
      $region34: #{artinet_forward.5} parent=31 // pred_check_branch
        %183 = sbr.rel (%p181) target = $region36
      $region35: #{artinet_forward.5} parent=31 // pred_region
        %184 = vst [vmem:[#allocation2] sm:$0xff] 0.0
        %185 = vst [vmem:[#allocation2 + $0x8] sm:$0xff] 0.0
      $region36: #{artinet_forward.5} parent=31 // pred_fallthru
        _
      %v186 = vld [vmem:[#allocation2] sm:$0xff]
      %v187 = vld [vmem:[#allocation2 + $0x8] sm:$0xff]
      %v188 = vld [vmem:[%s171] sm:$0x3]
      %v189 = vld [vmem:[%s178] sm:$0xff]
      %v190 = vld [vmem:[%s178 + $0x8] sm:$0xff]
      %v191 = vld [vmem:[%s178 + $0x10] sm:$0xff]
      %v192 = vld [vmem:[%s178 + $0x18] sm:$0xff]
      %v193 = vld [vmem:[%s178 + $0x20] sm:$0xff]
      %v194 = vld [vmem:[%s178 + $0x28] sm:$0xff]
      %v195 = vld [vmem:[%s178 + $0x30] sm:$0xff]
      %v196 = vld [vmem:[%s178 + $0x38] sm:$0xff]
      %v197 = vld [vmem:[%s178 + $0x40] sm:$0xff]
      %v198 = vld [vmem:[%s178 + $0x48] sm:$0xff]
      %v199 = vld [vmem:[%s178 + $0x50] sm:$0xff]
      %v200 = vld [vmem:[%s178 + $0x58] sm:$0xff]
      %v201 = vld [vmem:[%s178 + $0x60] sm:$0xff]
      %v202 = vld [vmem:[%s178 + $0x68] sm:$0xff]
      %v203 = vld [vmem:[%s178 + $0x70] sm:$0xff]
      %v204 = vld [vmem:[%s178 + $0x78] sm:$0xff]
      %v205 = vld [vmem:[%s178 + $0x80] sm:$0xff]
      %v206 = vld [vmem:[%s178 + $0x88] sm:$0xff]
      %v207 = vld [vmem:[%s178 + $0x90] sm:$0xff]
      %v208 = vld [vmem:[%s178 + $0x98] sm:$0xff]
      %v209 = vld [vmem:[%s178 + $0xa0] sm:$0xff]
      %v210 = vld [vmem:[%s178 + $0xa8] sm:$0xff]
      %v211 = vld [vmem:[%s178 + $0xb0] sm:$0xff]
      %v212 = vld [vmem:[%s178 + $0xb8] sm:$0xff]
      %v213 = vld [vmem:[%s178 + $0xc0] sm:$0xff]
      %v214 = vld [vmem:[%s178 + $0xc8] sm:$0xff]
      %v215 = vld [vmem:[%s178 + $0xd0] sm:$0xff]
      %v216 = vld [vmem:[%s178 + $0xd8] sm:$0xff]
      %v217 = vld [vmem:[%s178 + $0xe0] sm:$0xff]
      %v218 = vld [vmem:[%s178 + $0xe8] sm:$0xff]
      %v219 = vld [vmem:[%s178 + $0xf0] sm:$0xff]
      %v220 = vld [vmem:[%s178 + $0xf8] sm:$0xff]
      %v221 = vld [vmem:[%s178 + $0x100] sm:$0xff]
      %v222 = vld [vmem:[%s178 + $0x108] sm:$0xff]
      %v223 = vld [vmem:[%s178 + $0x110] sm:$0xff]
      %v224 = vld [vmem:[%s178 + $0x118] sm:$0xff]
      %v225 = vld [vmem:[%s178 + $0x120] sm:$0xff]
      %v226 = vld [vmem:[%s178 + $0x128] sm:$0xff]
      %v227 = vld [vmem:[%s178 + $0x130] sm:$0xff]
      %v228 = vld [vmem:[%s178 + $0x138] sm:$0xff]
      %v229 = vld [vmem:[%s178 + $0x140] sm:$0xff]
      %v230 = vld [vmem:[%s178 + $0x148] sm:$0xff]
      %v231 = vld [vmem:[%s178 + $0x150] sm:$0xff]
      %v232 = vld [vmem:[%s178 + $0x158] sm:$0xff]
      %v233 = vld [vmem:[%s178 + $0x160] sm:$0xff]
      %v234 = vld [vmem:[%s178 + $0x168] sm:$0xff]
      %v235 = vld [vmem:[%s178 + $0x170] sm:$0xff]
      %v236 = vld [vmem:[%s178 + $0x178] sm:$0xff]
      %v237 = vld [vmem:[%s178 + $0x180] sm:$0xff]
      %v238 = vld [vmem:[%s178 + $0x188] sm:$0xff]
      %v239 = vld [vmem:[%s178 + $0x190] sm:$0xff]
      %v240 = vld [vmem:[%s178 + $0x198] sm:$0xff]
      %v241 = vld [vmem:[%s178 + $0x1a0] sm:$0xff]
      %v242 = vld [vmem:[%s178 + $0x1a8] sm:$0xff]
      %v243 = vld [vmem:[%s178 + $0x1b0] sm:$0xff]
      %v244 = vld [vmem:[%s178 + $0x1b8] sm:$0xff]
      %v245 = vld [vmem:[%s178 + $0x1c0] sm:$0xff]
      %v246 = vld [vmem:[%s178 + $0x1c8] sm:$0xff]
      %v247 = vld [vmem:[%s178 + $0x1d0] sm:$0xff]
      %v248 = vld [vmem:[%s178 + $0x1d8] sm:$0xff]
      %v249 = vld [vmem:[%s178 + $0x1e0] sm:$0xff]
      %v250 = vld [vmem:[%s178 + $0x1e8] sm:$0xff]
      %v251 = vld [vmem:[%s178 + $0x1f0] sm:$0xff]
      %v252 = vld [vmem:[%s178 + $0x1f8] sm:$0xff]
      %v253 = vld [vmem:[%s178 + $0x200] sm:$0xff]
      %v254 = vld [vmem:[%s178 + $0x208] sm:$0xff]
      %v255 = vld [vmem:[%s178 + $0x210] sm:$0xff]
      %v256 = vld [vmem:[%s178 + $0x218] sm:$0xff]
      %v257 = vld [vmem:[%s178 + $0x220] sm:$0xff]
      %v258 = vld [vmem:[%s178 + $0x228] sm:$0xff]
      %v259 = vld [vmem:[%s178 + $0x230] sm:$0xff]
      %v260 = vld [vmem:[%s178 + $0x238] sm:$0xff]
      %v261 = vld [vmem:[%s178 + $0x240] sm:$0xff]
      %v262 = vld [vmem:[%s178 + $0x248] sm:$0xff]
      %v263 = vld [vmem:[%s178 + $0x250] sm:$0xff]
      %v264 = vld [vmem:[%s178 + $0x258] sm:$0xff]
      %v265 = vld [vmem:[%s178 + $0x260] sm:$0xff]
      %v266 = vld [vmem:[%s178 + $0x268] sm:$0xff]
      %v267 = vld [vmem:[%s178 + $0x270] sm:$0xff]
      %v268 = vld [vmem:[%s178 + $0x278] sm:$0xff]
      %v269 = vld [vmem:[%s178 + $0x280] sm:$0xff]
      %v270 = vld [vmem:[%s178 + $0x288] sm:$0xff]
      %v271 = vld [vmem:[%s178 + $0x290] sm:$0xff]
      %v272 = vld [vmem:[%s178 + $0x298] sm:$0xff]
      %v273 = vld [vmem:[%s178 + $0x2a0] sm:$0xff]
      %v274 = vld [vmem:[%s178 + $0x2a8] sm:$0xff]
      %v275 = vld [vmem:[%s178 + $0x2b0] sm:$0xff]
      %v276 = vld [vmem:[%s178 + $0x2b8] sm:$0xff]
      %v277 = vld [vmem:[%s178 + $0x2c0] sm:$0xff]
      %v278 = vld [vmem:[%s178 + $0x2c8] sm:$0xff]
      %v279 = vld [vmem:[%s178 + $0x2d0] sm:$0xff]
      %v280 = vld [vmem:[%s178 + $0x2d8] sm:$0xff]
      %v281 = vld [vmem:[%s178 + $0x2e0] sm:$0xff]
      %v282 = vld [vmem:[%s178 + $0x2e8] sm:$0xff]
      %v283 = vld [vmem:[%s178 + $0x2f0] sm:$0xff]
      %v284 = vld [vmem:[%s178 + $0x2f8] sm:$0xff]
      %v285 = vld [vmem:[%s178 + $0x300] sm:$0xff]
      %v286 = vld [vmem:[%s178 + $0x308] sm:$0xff]
      %v287 = vld [vmem:[%s178 + $0x310] sm:$0xff]
      %v288 = vld [vmem:[%s178 + $0x318] sm:$0xff]
      %v289 = vld [vmem:[%s178 + $0x320] sm:$0xff]
      %v290 = vld [vmem:[%s178 + $0x328] sm:$0xff]
      %v291 = vld [vmem:[%s178 + $0x330] sm:$0xff]
      %v292 = vld [vmem:[%s178 + $0x338] sm:$0xff]
      %v293 = vld [vmem:[%s178 + $0x340] sm:$0xff]
      %v294 = vld [vmem:[%s178 + $0x348] sm:$0xff]
      %v295 = vld [vmem:[%s178 + $0x350] sm:$0xff]
      %v296 = vld [vmem:[%s178 + $0x358] sm:$0xff]
      %v297 = vld [vmem:[%s178 + $0x360] sm:$0xff]
      %v298 = vld [vmem:[%s178 + $0x368] sm:$0xff]
      %v299 = vld [vmem:[%s178 + $0x370] sm:$0xff]
      %v300 = vld [vmem:[%s178 + $0x378] sm:$0xff]
      %v301 = vld [vmem:[%s178 + $0x380] sm:$0xff]
      %v302 = vld [vmem:[%s178 + $0x388] sm:$0xff]
      %v303 = vld [vmem:[%s178 + $0x390] sm:$0xff]
      %v304 = vld [vmem:[%s178 + $0x398] sm:$0xff]
      %v305 = vld [vmem:[%s178 + $0x3a0] sm:$0xff]
      %v306 = vld [vmem:[%s178 + $0x3a8] sm:$0xff]
      %v307 = vld [vmem:[%s178 + $0x3b0] sm:$0xff]
      %v308 = vld [vmem:[%s178 + $0x3b8] sm:$0xff]
      %v309 = vld [vmem:[%s178 + $0x3c0] sm:$0xff]
      %v310 = vld [vmem:[%s178 + $0x3c8] sm:$0xff]
      %v311 = vld [vmem:[%s178 + $0x3d0] sm:$0xff]
      %v312 = vld [vmem:[%s178 + $0x3d8] sm:$0xff]
      %v313 = vld [vmem:[%s178 + $0x3e0] sm:$0xff]
      %v314 = vld [vmem:[%s178 + $0x3e8] sm:$0xff]
      %v315 = vld [vmem:[%s178 + $0x3f0] sm:$0xff]
      %v316 = vld [vmem:[%s178 + $0x3f8] sm:$0xff]
      %v319 = vunpack.c.l.s4 1966171168
      %v320 = vunpack.c.0.s8 %v319
      %v321 = vlaneseq
      %v322 = vshrl.u32 %v321, 7
      %v323 = vsub.s32 %v320, %v322
      %v324 = vrot.slane %v188, %v323
      %v325 = vcombine.high %v324, %v324
      %v327 = vunpack.c.l.s4 1966171168
      %v328 = vunpack.c.0.s8 %v327
      %v329 = vlaneseq
      %v330 = vshrl.u32 %v329, 7
      %v331 = vsub.s32 %v328, %v330
      %v332 = vrot.slane %v324, %v331
      %v334 = vunpack.c.l.s4 1966171168
      %v335 = vunpack.c.0.s8 %v334
      %v336 = vlaneseq
      %v337 = vshrl.u32 %v336, 7
      %v338 = vsub.s32 %v335, %v337
      %v339 = vrot.slane %v325, %v338
      %v470 = vunpack.c.l.b16 %v189
      %v471 = vunpack.c.h.b16 %v189
      %v472 = vunpack.c.l.b16 %v190
      %v473 = vunpack.c.h.b16 %v190
      %v474 = vunpack.c.l.b16 %v191
      %v475 = vunpack.c.h.b16 %v191
      %v476 = vunpack.c.l.b16 %v192
      %v477 = vunpack.c.h.b16 %v192
      %v478 = vunpack.c.l.b16 %v193
      %v479 = vunpack.c.h.b16 %v193
      %v480 = vunpack.c.l.b16 %v194
      %v481 = vunpack.c.h.b16 %v194
      %v482 = vunpack.c.l.b16 %v195
      %v483 = vunpack.c.h.b16 %v195
      %v484 = vunpack.c.l.b16 %v196
      %v485 = vunpack.c.h.b16 %v196
      %v486 = vunpack.c.l.b16 %v197
      %v487 = vunpack.c.h.b16 %v197
      %v488 = vunpack.c.l.b16 %v198
      %v489 = vunpack.c.h.b16 %v198
      %v490 = vunpack.c.l.b16 %v199
      %v491 = vunpack.c.h.b16 %v199
      %v492 = vunpack.c.l.b16 %v200
      %v493 = vunpack.c.h.b16 %v200
      %v494 = vunpack.c.l.b16 %v201
      %v495 = vunpack.c.h.b16 %v201
      %v496 = vunpack.c.l.b16 %v202
      %v497 = vunpack.c.h.b16 %v202
      %v498 = vunpack.c.l.b16 %v203
      %v499 = vunpack.c.h.b16 %v203
      %v500 = vunpack.c.l.b16 %v204
      %v501 = vunpack.c.h.b16 %v204
      %v502 = vunpack.c.l.b16 %v205
      %v503 = vunpack.c.h.b16 %v205
      %v504 = vunpack.c.l.b16 %v206
      %v505 = vunpack.c.h.b16 %v206
      %v506 = vunpack.c.l.b16 %v207
      %v507 = vunpack.c.h.b16 %v207
      %v508 = vunpack.c.l.b16 %v208
      %v509 = vunpack.c.h.b16 %v208
      %v510 = vunpack.c.l.b16 %v209
      %v511 = vunpack.c.h.b16 %v209
      %v512 = vunpack.c.l.b16 %v210
      %v513 = vunpack.c.h.b16 %v210
      %v514 = vunpack.c.l.b16 %v211
      %v515 = vunpack.c.h.b16 %v211
      %v516 = vunpack.c.l.b16 %v212
      %v517 = vunpack.c.h.b16 %v212
      %v518 = vunpack.c.l.b16 %v213
      %v519 = vunpack.c.h.b16 %v213
      %v520 = vunpack.c.l.b16 %v214
      %v521 = vunpack.c.h.b16 %v214
      %v522 = vunpack.c.l.b16 %v215
      %v523 = vunpack.c.h.b16 %v215
      %v524 = vunpack.c.l.b16 %v216
      %v525 = vunpack.c.h.b16 %v216
      %v526 = vunpack.c.l.b16 %v217
      %v527 = vunpack.c.h.b16 %v217
      %v528 = vunpack.c.l.b16 %v218
      %v529 = vunpack.c.h.b16 %v218
      %v530 = vunpack.c.l.b16 %v219
      %v531 = vunpack.c.h.b16 %v219
      %v532 = vunpack.c.l.b16 %v220
      %v533 = vunpack.c.h.b16 %v220
      %v534 = vunpack.c.l.b16 %v221
      %v535 = vunpack.c.h.b16 %v221
      %v536 = vunpack.c.l.b16 %v222
      %v537 = vunpack.c.h.b16 %v222
      %v538 = vunpack.c.l.b16 %v223
      %v539 = vunpack.c.h.b16 %v223
      %v540 = vunpack.c.l.b16 %v224
      %v541 = vunpack.c.h.b16 %v224
      %v542 = vunpack.c.l.b16 %v225
      %v543 = vunpack.c.h.b16 %v225
      %v544 = vunpack.c.l.b16 %v226
      %v545 = vunpack.c.h.b16 %v226
      %v546 = vunpack.c.l.b16 %v227
      %v547 = vunpack.c.h.b16 %v227
      %v548 = vunpack.c.l.b16 %v228
      %v549 = vunpack.c.h.b16 %v228
      %v550 = vunpack.c.l.b16 %v229
      %v551 = vunpack.c.h.b16 %v229
      %v552 = vunpack.c.l.b16 %v230
      %v553 = vunpack.c.h.b16 %v230
      %v554 = vunpack.c.l.b16 %v231
      %v555 = vunpack.c.h.b16 %v231
      %v556 = vunpack.c.l.b16 %v232
      %v557 = vunpack.c.h.b16 %v232
      %v558 = vunpack.c.l.b16 %v233
      %v559 = vunpack.c.h.b16 %v233
      %v560 = vunpack.c.l.b16 %v234
      %v561 = vunpack.c.h.b16 %v234
      %v562 = vunpack.c.l.b16 %v235
      %v563 = vunpack.c.h.b16 %v235
      %v564 = vunpack.c.l.b16 %v236
      %v565 = vunpack.c.h.b16 %v236
      %v566 = vunpack.c.l.b16 %v237
      %v567 = vunpack.c.h.b16 %v237
      %v568 = vunpack.c.l.b16 %v238
      %v569 = vunpack.c.h.b16 %v238
      %v570 = vunpack.c.l.b16 %v239
      %v571 = vunpack.c.h.b16 %v239
      %v572 = vunpack.c.l.b16 %v240
      %v573 = vunpack.c.h.b16 %v240
      %v574 = vunpack.c.l.b16 %v241
      %v575 = vunpack.c.h.b16 %v241
      %v576 = vunpack.c.l.b16 %v242
      %v577 = vunpack.c.h.b16 %v242
      %v578 = vunpack.c.l.b16 %v243
      %v579 = vunpack.c.h.b16 %v243
      %v580 = vunpack.c.l.b16 %v244
      %v581 = vunpack.c.h.b16 %v244
      %v582 = vunpack.c.l.b16 %v245
      %v583 = vunpack.c.h.b16 %v245
      %v584 = vunpack.c.l.b16 %v246
      %v585 = vunpack.c.h.b16 %v246
      %v586 = vunpack.c.l.b16 %v247
      %v587 = vunpack.c.h.b16 %v247
      %v588 = vunpack.c.l.b16 %v248
      %v589 = vunpack.c.h.b16 %v248
      %v590 = vunpack.c.l.b16 %v249
      %v591 = vunpack.c.h.b16 %v249
      %v592 = vunpack.c.l.b16 %v250
      %v593 = vunpack.c.h.b16 %v250
      %v594 = vunpack.c.l.b16 %v251
      %v595 = vunpack.c.h.b16 %v251
      %v596 = vunpack.c.l.b16 %v252
      %v597 = vunpack.c.h.b16 %v252
      %v598 = vunpack.c.l.b16 %v253
      %v599 = vunpack.c.h.b16 %v253
      %v600 = vunpack.c.l.b16 %v254
      %v601 = vunpack.c.h.b16 %v254
      %v602 = vunpack.c.l.b16 %v255
      %v603 = vunpack.c.h.b16 %v255
      %v604 = vunpack.c.l.b16 %v256
      %v605 = vunpack.c.h.b16 %v256
      %v606 = vunpack.c.l.b16 %v257
      %v607 = vunpack.c.h.b16 %v257
      %v608 = vunpack.c.l.b16 %v258
      %v609 = vunpack.c.h.b16 %v258
      %v610 = vunpack.c.l.b16 %v259
      %v611 = vunpack.c.h.b16 %v259
      %v612 = vunpack.c.l.b16 %v260
      %v613 = vunpack.c.h.b16 %v260
      %v614 = vunpack.c.l.b16 %v261
      %v615 = vunpack.c.h.b16 %v261
      %v616 = vunpack.c.l.b16 %v262
      %v617 = vunpack.c.h.b16 %v262
      %v618 = vunpack.c.l.b16 %v263
      %v619 = vunpack.c.h.b16 %v263
      %v620 = vunpack.c.l.b16 %v264
      %v621 = vunpack.c.h.b16 %v264
      %v622 = vunpack.c.l.b16 %v265
      %v623 = vunpack.c.h.b16 %v265
      %v624 = vunpack.c.l.b16 %v266
      %v625 = vunpack.c.h.b16 %v266
      %v626 = vunpack.c.l.b16 %v267
      %v627 = vunpack.c.h.b16 %v267
      %v628 = vunpack.c.l.b16 %v268
      %v629 = vunpack.c.h.b16 %v268
      %v630 = vunpack.c.l.b16 %v269
      %v631 = vunpack.c.h.b16 %v269
      %v632 = vunpack.c.l.b16 %v270
      %v633 = vunpack.c.h.b16 %v270
      %v634 = vunpack.c.l.b16 %v271
      %v635 = vunpack.c.h.b16 %v271
      %v636 = vunpack.c.l.b16 %v272
      %v637 = vunpack.c.h.b16 %v272
      %v638 = vunpack.c.l.b16 %v273
      %v639 = vunpack.c.h.b16 %v273
      %v640 = vunpack.c.l.b16 %v274
      %v641 = vunpack.c.h.b16 %v274
      %v642 = vunpack.c.l.b16 %v275
      %v643 = vunpack.c.h.b16 %v275
      %v644 = vunpack.c.l.b16 %v276
      %v645 = vunpack.c.h.b16 %v276
      %v646 = vunpack.c.l.b16 %v277
      %v647 = vunpack.c.h.b16 %v277
      %v648 = vunpack.c.l.b16 %v278
      %v649 = vunpack.c.h.b16 %v278
      %v650 = vunpack.c.l.b16 %v279
      %v651 = vunpack.c.h.b16 %v279
      %v652 = vunpack.c.l.b16 %v280
      %v653 = vunpack.c.h.b16 %v280
      %v654 = vunpack.c.l.b16 %v281
      %v655 = vunpack.c.h.b16 %v281
      %v656 = vunpack.c.l.b16 %v282
      %v657 = vunpack.c.h.b16 %v282
      %v658 = vunpack.c.l.b16 %v283
      %v659 = vunpack.c.h.b16 %v283
      %v660 = vunpack.c.l.b16 %v284
      %v661 = vunpack.c.h.b16 %v284
      %v662 = vunpack.c.l.b16 %v285
      %v663 = vunpack.c.h.b16 %v285
      %v664 = vunpack.c.l.b16 %v286
      %v665 = vunpack.c.h.b16 %v286
      %v666 = vunpack.c.l.b16 %v287
      %v667 = vunpack.c.h.b16 %v287
      %v668 = vunpack.c.l.b16 %v288
      %v669 = vunpack.c.h.b16 %v288
      %v670 = vunpack.c.l.b16 %v289
      %v671 = vunpack.c.h.b16 %v289
      %v672 = vunpack.c.l.b16 %v290
      %v673 = vunpack.c.h.b16 %v290
      %v674 = vunpack.c.l.b16 %v291
      %v675 = vunpack.c.h.b16 %v291
      %v676 = vunpack.c.l.b16 %v292
      %v677 = vunpack.c.h.b16 %v292
      %v678 = vunpack.c.l.b16 %v293
      %v679 = vunpack.c.h.b16 %v293
      %v680 = vunpack.c.l.b16 %v294
      %v681 = vunpack.c.h.b16 %v294
      %v682 = vunpack.c.l.b16 %v295
      %v683 = vunpack.c.h.b16 %v295
      %v684 = vunpack.c.l.b16 %v296
      %v685 = vunpack.c.h.b16 %v296
      %v686 = vunpack.c.l.b16 %v297
      %v687 = vunpack.c.h.b16 %v297
      %v688 = vunpack.c.l.b16 %v298
      %v689 = vunpack.c.h.b16 %v298
      %v690 = vunpack.c.l.b16 %v299
      %v691 = vunpack.c.h.b16 %v299
      %v692 = vunpack.c.l.b16 %v300
      %v693 = vunpack.c.h.b16 %v300
      %v694 = vunpack.c.l.b16 %v301
      %v695 = vunpack.c.h.b16 %v301
      %v696 = vunpack.c.l.b16 %v302
      %v697 = vunpack.c.h.b16 %v302
      %v698 = vunpack.c.l.b16 %v303
      %v699 = vunpack.c.h.b16 %v303
      %v700 = vunpack.c.l.b16 %v304
      %v701 = vunpack.c.h.b16 %v304
      %v702 = vunpack.c.l.b16 %v305
      %v703 = vunpack.c.h.b16 %v305
      %v704 = vunpack.c.l.b16 %v306
      %v705 = vunpack.c.h.b16 %v306
      %v706 = vunpack.c.l.b16 %v307
      %v707 = vunpack.c.h.b16 %v307
      %v708 = vunpack.c.l.b16 %v308
      %v709 = vunpack.c.h.b16 %v308
      %v710 = vunpack.c.l.b16 %v309
      %v711 = vunpack.c.h.b16 %v309
      %v712 = vunpack.c.l.b16 %v310
      %v713 = vunpack.c.h.b16 %v310
      %v714 = vunpack.c.l.b16 %v311
      %v715 = vunpack.c.h.b16 %v311
      %v716 = vunpack.c.l.b16 %v312
      %v717 = vunpack.c.h.b16 %v312
      %v718 = vunpack.c.l.b16 %v313
      %v719 = vunpack.c.h.b16 %v313
      %v720 = vunpack.c.l.b16 %v314
      %v721 = vunpack.c.h.b16 %v314
      %v722 = vunpack.c.l.b16 %v315
      %v723 = vunpack.c.h.b16 %v315
      %v724 = vunpack.c.l.b16 %v316
      %v725 = vunpack.c.h.b16 %v316
      %v726 = vpack.c.b16 %v478, %v470
      %v727 = vpack.c.b16 %v479, %v471
      %v728 = vpack.c.b16 %v480, %v472
      %v729 = vpack.c.b16 %v481, %v473
      %v730 = vpack.c.b16 %v482, %v474
      %v731 = vpack.c.b16 %v483, %v475
      %v732 = vpack.c.b16 %v484, %v476
      %v733 = vpack.c.b16 %v485, %v477
      %v734 = vpack.c.b16 %v494, %v486
      %v735 = vpack.c.b16 %v495, %v487
      %v736 = vpack.c.b16 %v496, %v488
      %v737 = vpack.c.b16 %v497, %v489
      %v738 = vpack.c.b16 %v498, %v490
      %v739 = vpack.c.b16 %v499, %v491
      %v740 = vpack.c.b16 %v500, %v492
      %v741 = vpack.c.b16 %v501, %v493
      %v742 = vpack.c.b16 %v510, %v502
      %v743 = vpack.c.b16 %v511, %v503
      %v744 = vpack.c.b16 %v512, %v504
      %v745 = vpack.c.b16 %v513, %v505
      %v746 = vpack.c.b16 %v514, %v506
      %v747 = vpack.c.b16 %v515, %v507
      %v748 = vpack.c.b16 %v516, %v508
      %v749 = vpack.c.b16 %v517, %v509
      %v750 = vpack.c.b16 %v526, %v518
      %v751 = vpack.c.b16 %v527, %v519
      %v752 = vpack.c.b16 %v528, %v520
      %v753 = vpack.c.b16 %v529, %v521
      %v754 = vpack.c.b16 %v530, %v522
      %v755 = vpack.c.b16 %v531, %v523
      %v756 = vpack.c.b16 %v532, %v524
      %v757 = vpack.c.b16 %v533, %v525
      %v758 = vpack.c.b16 %v542, %v534
      %v759 = vpack.c.b16 %v543, %v535
      %v760 = vpack.c.b16 %v544, %v536
      %v761 = vpack.c.b16 %v545, %v537
      %v762 = vpack.c.b16 %v546, %v538
      %v763 = vpack.c.b16 %v547, %v539
      %v764 = vpack.c.b16 %v548, %v540
      %v765 = vpack.c.b16 %v549, %v541
      %v766 = vpack.c.b16 %v558, %v550
      %v767 = vpack.c.b16 %v559, %v551
      %v768 = vpack.c.b16 %v560, %v552
      %v769 = vpack.c.b16 %v561, %v553
      %v770 = vpack.c.b16 %v562, %v554
      %v771 = vpack.c.b16 %v563, %v555
      %v772 = vpack.c.b16 %v564, %v556
      %v773 = vpack.c.b16 %v565, %v557
      %v774 = vpack.c.b16 %v574, %v566
      %v775 = vpack.c.b16 %v575, %v567
      %v776 = vpack.c.b16 %v576, %v568
      %v777 = vpack.c.b16 %v577, %v569
      %v778 = vpack.c.b16 %v578, %v570
      %v779 = vpack.c.b16 %v579, %v571
      %v780 = vpack.c.b16 %v580, %v572
      %v781 = vpack.c.b16 %v581, %v573
      %v782 = vpack.c.b16 %v590, %v582
      %v783 = vpack.c.b16 %v591, %v583
      %v784 = vpack.c.b16 %v592, %v584
      %v785 = vpack.c.b16 %v593, %v585
      %v786 = vpack.c.b16 %v594, %v586
      %v787 = vpack.c.b16 %v595, %v587
      %v788 = vpack.c.b16 %v596, %v588
      %v789 = vpack.c.b16 %v597, %v589
      %v790 = vpack.c.b16 %v606, %v598
      %v791 = vpack.c.b16 %v607, %v599
      %v792 = vpack.c.b16 %v608, %v600
      %v793 = vpack.c.b16 %v609, %v601
      %v794 = vpack.c.b16 %v610, %v602
      %v795 = vpack.c.b16 %v611, %v603
      %v796 = vpack.c.b16 %v612, %v604
      %v797 = vpack.c.b16 %v613, %v605
      %v798 = vpack.c.b16 %v622, %v614
      %v799 = vpack.c.b16 %v623, %v615
      %v800 = vpack.c.b16 %v624, %v616
      %v801 = vpack.c.b16 %v625, %v617
      %v802 = vpack.c.b16 %v626, %v618
      %v803 = vpack.c.b16 %v627, %v619
      %v804 = vpack.c.b16 %v628, %v620
      %v805 = vpack.c.b16 %v629, %v621
      %v806 = vpack.c.b16 %v638, %v630
      %v807 = vpack.c.b16 %v639, %v631
      %v808 = vpack.c.b16 %v640, %v632
      %v809 = vpack.c.b16 %v641, %v633
      %v810 = vpack.c.b16 %v642, %v634
      %v811 = vpack.c.b16 %v643, %v635
      %v812 = vpack.c.b16 %v644, %v636
      %v813 = vpack.c.b16 %v645, %v637
      %v814 = vpack.c.b16 %v654, %v646
      %v815 = vpack.c.b16 %v655, %v647
      %v816 = vpack.c.b16 %v656, %v648
      %v817 = vpack.c.b16 %v657, %v649
      %v818 = vpack.c.b16 %v658, %v650
      %v819 = vpack.c.b16 %v659, %v651
      %v820 = vpack.c.b16 %v660, %v652
      %v821 = vpack.c.b16 %v661, %v653
      %v822 = vpack.c.b16 %v670, %v662
      %v823 = vpack.c.b16 %v671, %v663
      %v824 = vpack.c.b16 %v672, %v664
      %v825 = vpack.c.b16 %v673, %v665
      %v826 = vpack.c.b16 %v674, %v666
      %v827 = vpack.c.b16 %v675, %v667
      %v828 = vpack.c.b16 %v676, %v668
      %v829 = vpack.c.b16 %v677, %v669
      %v830 = vpack.c.b16 %v686, %v678
      %v831 = vpack.c.b16 %v687, %v679
      %v832 = vpack.c.b16 %v688, %v680
      %v833 = vpack.c.b16 %v689, %v681
      %v834 = vpack.c.b16 %v690, %v682
      %v835 = vpack.c.b16 %v691, %v683
      %v836 = vpack.c.b16 %v692, %v684
      %v837 = vpack.c.b16 %v693, %v685
      %v838 = vpack.c.b16 %v702, %v694
      %v839 = vpack.c.b16 %v703, %v695
      %v840 = vpack.c.b16 %v704, %v696
      %v841 = vpack.c.b16 %v705, %v697
      %v842 = vpack.c.b16 %v706, %v698
      %v843 = vpack.c.b16 %v707, %v699
      %v844 = vpack.c.b16 %v708, %v700
      %v845 = vpack.c.b16 %v709, %v701
      %v846 = vpack.c.b16 %v718, %v710
      %v847 = vpack.c.b16 %v719, %v711
      %v848 = vpack.c.b16 %v720, %v712
      %v849 = vpack.c.b16 %v721, %v713
      %v850 = vpack.c.b16 %v722, %v714
      %v851 = vpack.c.b16 %v723, %v715
      %v852 = vpack.c.b16 %v724, %v716
      %v853 = vpack.c.b16 %v725, %v717
      %982 = vmatprep.subr.bf16.mxu0 %v727
      %983 = vmatpush1.bf16.msra.mxu0 %v726
      %984 = vmatprep.subr.bf16.mxu0 %v735
      %985 = vmatpush1.bf16.msra.mxu0 %v734
      %986 = vmatprep.subr.bf16.mxu0 %v743
      %987 = vmatpush1.bf16.msra.mxu0 %v742
      %988 = vmatprep.subr.bf16.mxu0 %v751
      %989 = vmatpush1.bf16.msra.mxu0 %v750
      %990 = vmatprep.subr.bf16.mxu0 %v759
      %991 = vmatpush1.bf16.msra.mxu0 %v758
      %992 = vmatprep.subr.bf16.mxu0 %v767
      %993 = vmatpush1.bf16.msra.mxu0 %v766
      %994 = vmatprep.subr.bf16.mxu0 %v775
      %995 = vmatpush1.bf16.msra.mxu0 %v774
      %996 = vmatprep.subr.bf16.mxu0 %v783
      %997 = vmatpush1.bf16.msra.mxu0 %v782
      %998 = vmatprep.subr.bf16.mxu0 %v791
      %999 = vmatpush1.bf16.msra.mxu0 %v790
      %1000 = vmatprep.subr.bf16.mxu0 %v799
      %1001 = vmatpush1.bf16.msra.mxu0 %v798
      %1002 = vmatprep.subr.bf16.mxu0 %v807
      %1003 = vmatpush1.bf16.msra.mxu0 %v806
      %1004 = vmatprep.subr.bf16.mxu0 %v815
      %1005 = vmatpush1.bf16.msra.mxu0 %v814
      %1006 = vmatprep.subr.bf16.mxu0 %v823
      %1007 = vmatpush1.bf16.msra.mxu0 %v822
      %1008 = vmatprep.subr.bf16.mxu0 %v831
      %1009 = vmatpush1.bf16.msra.mxu0 %v830
      %1010 = vmatprep.subr.bf16.mxu0 %v839
      %1011 = vmatpush1.bf16.msra.mxu0 %v838
      %1012 = vmatprep.subr.bf16.mxu0 %v847
      %1013 = vmatpush1.bf16.msra.mxu0 %v846
      %1014 = vmatprep.mubr.bf16.mxu0 %v339
      %1015 = vmatmul.mubr.bf16.gmra.mrb[0].mxu0 %v332
      %v1016 = vpop.f32.mrb[0].mxu0
      %v1017 = vadd.f32 0.0, %v1016
      %v1018 = vpop.f32.mrb[0].mxu0
      %v1019 = vadd.f32 0.0, %v1018
      %v1020 = vpop.f32.mrb[0].mxu0
      %v1021 = vpop.f32.mrb[0].mxu0
      %1022 = vdwg.mxu0
      %1023 = vmatprep.subr.bf16.mxu0 %v729
      %1024 = vmatpush1.bf16.msra.mxu0 %v728
      %1025 = vmatprep.subr.bf16.mxu0 %v737
      %1026 = vmatpush1.bf16.msra.mxu0 %v736
      %1027 = vmatprep.subr.bf16.mxu0 %v745
      %1028 = vmatpush1.bf16.msra.mxu0 %v744
      %1029 = vmatprep.subr.bf16.mxu0 %v753
      %1030 = vmatpush1.bf16.msra.mxu0 %v752
      %1031 = vmatprep.subr.bf16.mxu0 %v761
      %1032 = vmatpush1.bf16.msra.mxu0 %v760
      %1033 = vmatprep.subr.bf16.mxu0 %v769
      %1034 = vmatpush1.bf16.msra.mxu0 %v768
      %1035 = vmatprep.subr.bf16.mxu0 %v777
      %1036 = vmatpush1.bf16.msra.mxu0 %v776
      %1037 = vmatprep.subr.bf16.mxu0 %v785
      %1038 = vmatpush1.bf16.msra.mxu0 %v784
      %1039 = vmatprep.subr.bf16.mxu0 %v793
      %1040 = vmatpush1.bf16.msra.mxu0 %v792
      %1041 = vmatprep.subr.bf16.mxu0 %v801
      %1042 = vmatpush1.bf16.msra.mxu0 %v800
      %1043 = vmatprep.subr.bf16.mxu0 %v809
      %1044 = vmatpush1.bf16.msra.mxu0 %v808
      %1045 = vmatprep.subr.bf16.mxu0 %v817
      %1046 = vmatpush1.bf16.msra.mxu0 %v816
      %1047 = vmatprep.subr.bf16.mxu0 %v825
      %1048 = vmatpush1.bf16.msra.mxu0 %v824
      %1049 = vmatprep.subr.bf16.mxu0 %v833
      %1050 = vmatpush1.bf16.msra.mxu0 %v832
      %1051 = vmatprep.subr.bf16.mxu0 %v841
      %1052 = vmatpush1.bf16.msra.mxu0 %v840
      %1053 = vmatprep.subr.bf16.mxu0 %v849
      %1054 = vmatpush1.bf16.msra.mxu0 %v848
      %1055 = vmatprep.mubr.bf16.mxu0 %v339
      %1056 = vmatmul.mubr.bf16.gmra.mrb[0].mxu0 %v332
      %v1057 = vpop.f32.mrb[0].mxu0
      %v1058 = vadd.f32 0.0, %v1057
      %v1059 = vpop.f32.mrb[0].mxu0
      %v1060 = vadd.f32 0.0, %v1059
      %v1061 = vpop.f32.mrb[0].mxu0
      %v1062 = vpop.f32.mrb[0].mxu0
      %1063 = vdwg.mxu0
      %1064 = vmatprep.subr.bf16.mxu0 %v731
      %1065 = vmatpush1.bf16.msra.mxu0 %v730
      %1066 = vmatprep.subr.bf16.mxu0 %v739
      %1067 = vmatpush1.bf16.msra.mxu0 %v738
      %1068 = vmatprep.subr.bf16.mxu0 %v747
      %1069 = vmatpush1.bf16.msra.mxu0 %v746
      %1070 = vmatprep.subr.bf16.mxu0 %v755
      %1071 = vmatpush1.bf16.msra.mxu0 %v754
      %1072 = vmatprep.subr.bf16.mxu0 %v763
      %1073 = vmatpush1.bf16.msra.mxu0 %v762
      %1074 = vmatprep.subr.bf16.mxu0 %v771
      %1075 = vmatpush1.bf16.msra.mxu0 %v770
      %1076 = vmatprep.subr.bf16.mxu0 %v779
      %1077 = vmatpush1.bf16.msra.mxu0 %v778
      %1078 = vmatprep.subr.bf16.mxu0 %v787
      %1079 = vmatpush1.bf16.msra.mxu0 %v786
      %1080 = vmatprep.subr.bf16.mxu0 %v795
      %1081 = vmatpush1.bf16.msra.mxu0 %v794
      %1082 = vmatprep.subr.bf16.mxu0 %v803
      %1083 = vmatpush1.bf16.msra.mxu0 %v802
      %1084 = vmatprep.subr.bf16.mxu0 %v811
      %1085 = vmatpush1.bf16.msra.mxu0 %v810
      %1086 = vmatprep.subr.bf16.mxu0 %v819
      %1087 = vmatpush1.bf16.msra.mxu0 %v818
      %1088 = vmatprep.subr.bf16.mxu0 %v827
      %1089 = vmatpush1.bf16.msra.mxu0 %v826
      %1090 = vmatprep.subr.bf16.mxu0 %v835
      %1091 = vmatpush1.bf16.msra.mxu0 %v834
      %1092 = vmatprep.subr.bf16.mxu0 %v843
      %1093 = vmatpush1.bf16.msra.mxu0 %v842
      %1094 = vmatprep.subr.bf16.mxu0 %v851
      %1095 = vmatpush1.bf16.msra.mxu0 %v850
      %1096 = vmatprep.mubr.bf16.mxu0 %v339
      %1097 = vmatmul.mubr.bf16.gmra.mrb[0].mxu0 %v332
      %v1098 = vpop.f32.mrb[0].mxu0
      %v1099 = vadd.f32 0.0, %v1098
      %v1100 = vpop.f32.mrb[0].mxu0
      %v1101 = vadd.f32 0.0, %v1100
      %v1102 = vpop.f32.mrb[0].mxu0
      %v1103 = vpop.f32.mrb[0].mxu0
      %1104 = vdwg.mxu0
      %1105 = vmatprep.subr.bf16.mxu0 %v733
      %1106 = vmatpush1.bf16.msra.mxu0 %v732
      %1107 = vmatprep.subr.bf16.mxu0 %v741
      %1108 = vmatpush1.bf16.msra.mxu0 %v740
      %1109 = vmatprep.subr.bf16.mxu0 %v749
      %1110 = vmatpush1.bf16.msra.mxu0 %v748
      %1111 = vmatprep.subr.bf16.mxu0 %v757
      %1112 = vmatpush1.bf16.msra.mxu0 %v756
      %1113 = vmatprep.subr.bf16.mxu0 %v765
      %1114 = vmatpush1.bf16.msra.mxu0 %v764
      %1115 = vmatprep.subr.bf16.mxu0 %v773
      %1116 = vmatpush1.bf16.msra.mxu0 %v772
      %1117 = vmatprep.subr.bf16.mxu0 %v781
      %1118 = vmatpush1.bf16.msra.mxu0 %v780
      %1119 = vmatprep.subr.bf16.mxu0 %v789
      %1120 = vmatpush1.bf16.msra.mxu0 %v788
      %1121 = vmatprep.subr.bf16.mxu0 %v797
      %1122 = vmatpush1.bf16.msra.mxu0 %v796
      %1123 = vmatprep.subr.bf16.mxu0 %v805
      %1124 = vmatpush1.bf16.msra.mxu0 %v804
      %1125 = vmatprep.subr.bf16.mxu0 %v813
      %1126 = vmatpush1.bf16.msra.mxu0 %v812
      %1127 = vmatprep.subr.bf16.mxu0 %v821
      %1128 = vmatpush1.bf16.msra.mxu0 %v820
      %1129 = vmatprep.subr.bf16.mxu0 %v829
      %1130 = vmatpush1.bf16.msra.mxu0 %v828
      %1131 = vmatprep.subr.bf16.mxu0 %v837
      %1132 = vmatpush1.bf16.msra.mxu0 %v836
      %1133 = vmatprep.subr.bf16.mxu0 %v845
      %1134 = vmatpush1.bf16.msra.mxu0 %v844
      %1135 = vmatprep.subr.bf16.mxu0 %v853
      %1136 = vmatpush1.bf16.msra.mxu0 %v852
      %1137 = vmatprep.mubr.bf16.mxu0 %v339
      %1138 = vmatmul.mubr.bf16.gmra.mrb[0].mxu0 %v332
      %v1139 = vpop.f32.mrb[0].mxu0
      %v1140 = vadd.f32 0.0, %v1139
      %v1141 = vpop.f32.mrb[0].mxu0
      %v1142 = vadd.f32 0.0, %v1141
      %v1143 = vpop.f32.mrb[0].mxu0
      %v1144 = vpop.f32.mrb[0].mxu0
      %1145 = vdwg.mxu0
      %v1154 = vcombine.low %v1017, %v1019
      %v1155 = vcombine.low %v1058, %v1060
      %v1157 = vunpack.c.l.s4 1983009808
      %v1158 = vunpack.c.0.s8 %v1157
      %v1159 = vlaneseq
      %v1160 = vshrl.u32 %v1159, 7
      %v1161 = vsub.s32 %v1158, %v1160
      %v1162 = vrot.slane %v1154, %v1161
      %v1164 = vunpack.c.l.s4 1983009808
      %v1165 = vunpack.c.0.s8 %v1164
      %v1166 = vlaneseq
      %v1167 = vshrl.u32 %v1166, 7
      %v1168 = vsub.s32 %v1165, %v1167
      %v1169 = vrot.slane %v1155, %v1168
      %v1170 = vcombine.low %v1162, %v1169
      %v1171 = vcombine.low %v1099, %v1101
      %v1172 = vcombine.low %v1140, %v1142
      %v1174 = vunpack.c.l.s4 1983009808
      %v1175 = vunpack.c.0.s8 %v1174
      %v1176 = vlaneseq
      %v1177 = vshrl.u32 %v1176, 7
      %v1178 = vsub.s32 %v1175, %v1177
      %v1179 = vrot.slane %v1171, %v1178
      %v1181 = vunpack.c.l.s4 1983009808
      %v1182 = vunpack.c.0.s8 %v1181
      %v1183 = vlaneseq
      %v1184 = vshrl.u32 %v1183, 7
      %v1185 = vsub.s32 %v1182, %v1184
      %v1186 = vrot.slane %v1172, %v1185
      %v1187 = vcombine.low %v1179, %v1186
      %v1190 = vadd.f32 %v186, %v1170
      %v1191 = vadd.f32 %v187, %v1187
      %1192 = vst [vmem:[#allocation2] sm:$0xff] %v1190
      %1193 = vst [vmem:[#allocation2 + $0x8] sm:$0xff] %v1191
      %p1194 = scmp.eq.s32.totalorder %s14, 3
      // Predicated region
      $region37: #{artinet_forward.5} parent=31 // pred_check
        %p1195 = pneg %p1194
      $region38: #{artinet_forward.5} parent=31 // pred_check_branch
        %1197 = sbr.rel (%p1195) target = $region40
      $region39: #{artinet_forward.5} parent=31 // pred_region
        %v1198 = vld [vmem:[#allocation2] ss:$2 sm:$0xff]
        %v1199 = vld [vmem:[%s2] sm:$0x1]
        %1201 = vset.pattern.permute.xlu0 5
        %1202 = vperm.xlu0 %1201, %v1199
        %v1203 = vpop.permute.xlu0 %1202
        %v1204 = vlaneseq
        %v1205 = vshrl.u32 %v1204, 7
        %v1206 = vsub.s32 0, %v1205
        %v1207 = vrot.slane %v1203, %v1206
        %v1209 = vadd.f32 %v1198, %v1207
        %s1210 = scalar_lea.vmem [#allocation2], 1
        %v1211 = vld [vmem:[%s1210] ss:$2 sm:$0xff]
        %v1212 = vld [vmem:[%s2 + $0x1] sm:$0x1]
        %1214 = vset.pattern.permute.xlu0 5
        %1215 = vperm.xlu0 %1214, %v1212
        %v1216 = vpop.permute.xlu0 %1215
        %v1217 = vlaneseq
        %v1218 = vshrl.u32 %v1217, 7
        %v1219 = vsub.s32 0, %v1218
        %v1220 = vrot.slane %v1216, %v1219
        %v1222 = vadd.f32 %v1211, %v1220
        %v1224 = vlaneseq
        %v1225 = vshrl.u32 %v1224, 7
        %v1226 = vsub.s32 0, %v1225
        %v1227 = vrot.slane %v1209, %v1226
        %v1228 = vlaneseq
        %v1229 = vshrl.u32 %v1228, 7
        %v1230 = vsub.s32 1, %v1229
        %v1231 = vrot.slane %v1209, %v1230
        %v1232 = vlaneseq
        %v1233 = vshrl.u32 %v1232, 7
        %v1234 = vsub.s32 2, %v1233
        %v1235 = vrot.slane %v1209, %v1234
        %v1236 = vlaneseq
        %v1237 = vshrl.u32 %v1236, 7
        %v1238 = vsub.s32 3, %v1237
        %v1239 = vrot.slane %v1209, %v1238
        %v1240 = vlaneseq
        %v1241 = vshrl.u32 %v1240, 7
        %v1242 = vsub.s32 4, %v1241
        %v1243 = vrot.slane %v1209, %v1242
        %v1244 = vlaneseq
        %v1245 = vshrl.u32 %v1244, 7
        %v1246 = vsub.s32 5, %v1245
        %v1247 = vrot.slane %v1209, %v1246
        %v1248 = vlaneseq
        %v1249 = vshrl.u32 %v1248, 7
        %v1250 = vsub.s32 6, %v1249
        %v1251 = vrot.slane %v1209, %v1250
        %v1252 = vlaneseq
        %v1253 = vshrl.u32 %v1252, 7
        %v1254 = vsub.s32 7, %v1253
        %v1255 = vrot.slane %v1209, %v1254
        %vm1264 = vcmask 1040384
        %v1265 = vsel %vm1264, %v1227, 0.0
        %v1266 = vsel %vm1264, %v1231, 0.0
        %v1267 = vadd.f32 %v1265, %v1266
        %v1268 = vsel %vm1264, %v1235, 0.0
        %v1269 = vadd.f32 %v1267, %v1268
        %v1270 = vsel %vm1264, %v1239, 0.0
        %v1271 = vadd.f32 %v1269, %v1270
        %v1272 = vsel %vm1264, %v1243, 0.0
        %v1273 = vadd.f32 %v1271, %v1272
        %v1274 = vsel %vm1264, %v1247, 0.0
        %v1275 = vadd.f32 %v1273, %v1274
        %v1276 = vsel %vm1264, %v1251, 0.0
        %v1277 = vadd.f32 %v1275, %v1276
        %v1278 = vsel %vm1264, %v1255, 0.0
        %v1279 = vadd.f32 %v1277, %v1278
        %1280 = vadd.xlane.f32.xlu0 %v1279
        %v1281 = vpop.xlane.xlu0 %1280
        %v1282 = vrcp.pop 1024.0
        %v1283 = vmul.f32 %v1281, %v1282
        %v1285 = vlaneseq
        %v1286 = vshrl.u32 %v1285, 7
        %v1287 = vsub.s32 0, %v1286
        %v1288 = vrot.slane %v1283, %v1287
        %v1290 = vsub.f32 %v1209, %v1288
        %v1291 = vmul.f32 %v1290, %v1290
        %v1293 = vlaneseq
        %v1294 = vshrl.u32 %v1293, 7
        %v1295 = vsub.s32 0, %v1294
        %v1296 = vrot.slane %v1291, %v1295
        %v1297 = vlaneseq
        %v1298 = vshrl.u32 %v1297, 7
        %v1299 = vsub.s32 1, %v1298
        %v1300 = vrot.slane %v1291, %v1299
        %v1301 = vlaneseq
        %v1302 = vshrl.u32 %v1301, 7
        %v1303 = vsub.s32 2, %v1302
        %v1304 = vrot.slane %v1291, %v1303
        %v1305 = vlaneseq
        %v1306 = vshrl.u32 %v1305, 7
        %v1307 = vsub.s32 3, %v1306
        %v1308 = vrot.slane %v1291, %v1307
        %v1309 = vlaneseq
        %v1310 = vshrl.u32 %v1309, 7
        %v1311 = vsub.s32 4, %v1310
        %v1312 = vrot.slane %v1291, %v1311
        %v1313 = vlaneseq
        %v1314 = vshrl.u32 %v1313, 7
        %v1315 = vsub.s32 5, %v1314
        %v1316 = vrot.slane %v1291, %v1315
        %v1317 = vlaneseq
        %v1318 = vshrl.u32 %v1317, 7
        %v1319 = vsub.s32 6, %v1318
        %v1320 = vrot.slane %v1291, %v1319
        %v1321 = vlaneseq
        %v1322 = vshrl.u32 %v1321, 7
        %v1323 = vsub.s32 7, %v1322
        %v1324 = vrot.slane %v1291, %v1323
        %v1333 = vsel %vm1264, %v1296, 0.0
        %v1334 = vsel %vm1264, %v1300, 0.0
        %v1335 = vadd.f32 %v1333, %v1334
        %v1336 = vsel %vm1264, %v1304, 0.0
        %v1337 = vadd.f32 %v1335, %v1336
        %v1338 = vsel %vm1264, %v1308, 0.0
        %v1339 = vadd.f32 %v1337, %v1338
        %v1340 = vsel %vm1264, %v1312, 0.0
        %v1341 = vadd.f32 %v1339, %v1340
        %v1342 = vsel %vm1264, %v1316, 0.0
        %v1343 = vadd.f32 %v1341, %v1342
        %v1344 = vsel %vm1264, %v1320, 0.0
        %v1345 = vadd.f32 %v1343, %v1344
        %v1346 = vsel %vm1264, %v1324, 0.0
        %v1347 = vadd.f32 %v1345, %v1346
        %1348 = vadd.xlane.f32.xlu0 %v1347
        %v1349 = vpop.xlane.xlu0 %1348
        %v1350 = vmul.f32 %v1349, %v1282
        %v1351 = vadd.f32 %v1350, 1e-05
        %v1352 = vrsqrt.pop %v1351
        %v1354 = vlaneseq
        %v1355 = vshrl.u32 %v1354, 7
        %v1356 = vsub.s32 0, %v1355
        %v1357 = vrot.slane %v1352, %v1356
        %v1359 = vmul.f32 %v1290, %v1357
        %1360 = vset.pattern.permute.xlu0 0
        %1361 = vperm.xlu0 %1360, %v1199
        %v1362 = vpop.permute.xlu0 %1361
        %v1363 = vlaneseq
        %v1364 = vshrl.u32 %v1363, 7
        %v1365 = vsub.s32 0, %v1364
        %v1366 = vrot.slane %v1362, %v1365
        %v1368 = vmul.f32 %v1359, %v1366
        %1369 = vset.pattern.permute.xlu0 1
        %1370 = vperm.xlu0 %1369, %v1199
        %v1371 = vpop.permute.xlu0 %1370
        %v1372 = vlaneseq
        %v1373 = vshrl.u32 %v1372, 7
        %v1374 = vsub.s32 0, %v1373
        %v1375 = vrot.slane %v1371, %v1374
        %v1377 = vadd.f32 %v1368, %v1375
        %v1378 = vmax.f32 %v1377, 0.0
        %v1380 = vlaneseq
        %v1381 = vshrl.u32 %v1380, 7
        %v1382 = vsub.s32 0, %v1381
        %v1383 = vrot.slane %v1222, %v1382
        %v1384 = vlaneseq
        %v1385 = vshrl.u32 %v1384, 7
        %v1386 = vsub.s32 1, %v1385
        %v1387 = vrot.slane %v1222, %v1386
        %v1388 = vlaneseq
        %v1389 = vshrl.u32 %v1388, 7
        %v1390 = vsub.s32 2, %v1389
        %v1391 = vrot.slane %v1222, %v1390
        %v1392 = vlaneseq
        %v1393 = vshrl.u32 %v1392, 7
        %v1394 = vsub.s32 3, %v1393
        %v1395 = vrot.slane %v1222, %v1394
        %v1396 = vlaneseq
        %v1397 = vshrl.u32 %v1396, 7
        %v1398 = vsub.s32 4, %v1397
        %v1399 = vrot.slane %v1222, %v1398
        %v1400 = vlaneseq
        %v1401 = vshrl.u32 %v1400, 7
        %v1402 = vsub.s32 5, %v1401
        %v1403 = vrot.slane %v1222, %v1402
        %v1404 = vlaneseq
        %v1405 = vshrl.u32 %v1404, 7
        %v1406 = vsub.s32 6, %v1405
        %v1407 = vrot.slane %v1222, %v1406
        %v1408 = vlaneseq
        %v1409 = vshrl.u32 %v1408, 7
        %v1410 = vsub.s32 7, %v1409
        %v1411 = vrot.slane %v1222, %v1410
        %v1420 = vsel %vm1264, %v1383, 0.0
        %v1421 = vsel %vm1264, %v1387, 0.0
        %v1422 = vadd.f32 %v1420, %v1421
        %v1423 = vsel %vm1264, %v1391, 0.0
        %v1424 = vadd.f32 %v1422, %v1423
        %v1425 = vsel %vm1264, %v1395, 0.0
        %v1426 = vadd.f32 %v1424, %v1425
        %v1427 = vsel %vm1264, %v1399, 0.0
        %v1428 = vadd.f32 %v1426, %v1427
        %v1429 = vsel %vm1264, %v1403, 0.0
        %v1430 = vadd.f32 %v1428, %v1429
        %v1431 = vsel %vm1264, %v1407, 0.0
        %v1432 = vadd.f32 %v1430, %v1431
        %v1433 = vsel %vm1264, %v1411, 0.0
        %v1434 = vadd.f32 %v1432, %v1433
        %1435 = vadd.xlane.f32.xlu0 %v1434
        %v1436 = vpop.xlane.xlu0 %1435
        %v1437 = vmul.f32 %v1436, %v1282
        %v1439 = vlaneseq
        %v1440 = vshrl.u32 %v1439, 7
        %v1441 = vsub.s32 0, %v1440
        %v1442 = vrot.slane %v1437, %v1441
        %v1444 = vsub.f32 %v1222, %v1442
        %v1445 = vmul.f32 %v1444, %v1444
        %v1447 = vlaneseq
        %v1448 = vshrl.u32 %v1447, 7
        %v1449 = vsub.s32 0, %v1448
        %v1450 = vrot.slane %v1445, %v1449
        %v1451 = vlaneseq
        %v1452 = vshrl.u32 %v1451, 7
        %v1453 = vsub.s32 1, %v1452
        %v1454 = vrot.slane %v1445, %v1453
        %v1455 = vlaneseq
        %v1456 = vshrl.u32 %v1455, 7
        %v1457 = vsub.s32 2, %v1456
        %v1458 = vrot.slane %v1445, %v1457
        %v1459 = vlaneseq
        %v1460 = vshrl.u32 %v1459, 7
        %v1461 = vsub.s32 3, %v1460
        %v1462 = vrot.slane %v1445, %v1461
        %v1463 = vlaneseq
        %v1464 = vshrl.u32 %v1463, 7
        %v1465 = vsub.s32 4, %v1464
        %v1466 = vrot.slane %v1445, %v1465
        %v1467 = vlaneseq
        %v1468 = vshrl.u32 %v1467, 7
        %v1469 = vsub.s32 5, %v1468
        %v1470 = vrot.slane %v1445, %v1469
        %v1471 = vlaneseq
        %v1472 = vshrl.u32 %v1471, 7
        %v1473 = vsub.s32 6, %v1472
        %v1474 = vrot.slane %v1445, %v1473
        %v1475 = vlaneseq
        %v1476 = vshrl.u32 %v1475, 7
        %v1477 = vsub.s32 7, %v1476
        %v1478 = vrot.slane %v1445, %v1477
        %v1487 = vsel %vm1264, %v1450, 0.0
        %v1488 = vsel %vm1264, %v1454, 0.0
        %v1489 = vadd.f32 %v1487, %v1488
        %v1490 = vsel %vm1264, %v1458, 0.0
        %v1491 = vadd.f32 %v1489, %v1490
        %v1492 = vsel %vm1264, %v1462, 0.0
        %v1493 = vadd.f32 %v1491, %v1492
        %v1494 = vsel %vm1264, %v1466, 0.0
        %v1495 = vadd.f32 %v1493, %v1494
        %v1496 = vsel %vm1264, %v1470, 0.0
        %v1497 = vadd.f32 %v1495, %v1496
        %v1498 = vsel %vm1264, %v1474, 0.0
        %v1499 = vadd.f32 %v1497, %v1498
        %v1500 = vsel %vm1264, %v1478, 0.0
        %v1501 = vadd.f32 %v1499, %v1500
        %1502 = vadd.xlane.f32.xlu0 %v1501
        %v1503 = vpop.xlane.xlu0 %1502
        %v1504 = vmul.f32 %v1503, %v1282
        %v1505 = vadd.f32 %v1504, 1e-05
        %v1506 = vrsqrt.pop %v1505
        %v1508 = vlaneseq
        %v1509 = vshrl.u32 %v1508, 7
        %v1510 = vsub.s32 0, %v1509
        %v1511 = vrot.slane %v1506, %v1510
        %v1513 = vmul.f32 %v1444, %v1511
        %1514 = vset.pattern.permute.xlu0 0
        %1515 = vperm.xlu0 %1514, %v1212
        %v1516 = vpop.permute.xlu0 %1515
        %v1517 = vlaneseq
        %v1518 = vshrl.u32 %v1517, 7
        %v1519 = vsub.s32 0, %v1518
        %v1520 = vrot.slane %v1516, %v1519
        %v1522 = vmul.f32 %v1513, %v1520
        %1523 = vset.pattern.permute.xlu0 1
        %1524 = vperm.xlu0 %1523, %v1212
        %v1525 = vpop.permute.xlu0 %1524
        %v1526 = vlaneseq
        %v1527 = vshrl.u32 %v1526, 7
        %v1528 = vsub.s32 0, %v1527
        %v1529 = vrot.slane %v1525, %v1528
        %v1531 = vadd.f32 %v1522, %v1529
        %v1532 = vmax.f32 %v1531, 0.0
        %1533 = vset.pattern.permute.xlu0 2
        %1534 = vperm.xlu0 %1533, %v1199
        %v1535 = vpop.permute.xlu0 %1534
        %v1538 = vlaneseq
        %v1539 = vshrl.u32 %v1538, 7
        %v1540 = vsub.s32 0, %v1539
        %v1541 = vrot.slane %v1378, %v1540
        %v1542 = vlaneseq
        %v1543 = vshrl.u32 %v1542, 7
        %v1544 = vsub.s32 1, %v1543
        %v1545 = vrot.slane %v1378, %v1544
        %v1546 = vlaneseq
        %v1547 = vshrl.u32 %v1546, 7
        %v1548 = vsub.s32 2, %v1547
        %v1549 = vrot.slane %v1378, %v1548
        %v1550 = vlaneseq
        %v1551 = vshrl.u32 %v1550, 7
        %v1552 = vsub.s32 3, %v1551
        %v1553 = vrot.slane %v1378, %v1552
        %v1554 = vlaneseq
        %v1555 = vshrl.u32 %v1554, 7
        %v1556 = vsub.s32 4, %v1555
        %v1557 = vrot.slane %v1378, %v1556
        %v1558 = vlaneseq
        %v1559 = vshrl.u32 %v1558, 7
        %v1560 = vsub.s32 5, %v1559
        %v1561 = vrot.slane %v1378, %v1560
        %v1562 = vlaneseq
        %v1563 = vshrl.u32 %v1562, 7
        %v1564 = vsub.s32 6, %v1563
        %v1565 = vrot.slane %v1378, %v1564
        %v1566 = vlaneseq
        %v1567 = vshrl.u32 %v1566, 7
        %v1568 = vsub.s32 7, %v1567
        %v1569 = vrot.slane %v1378, %v1568
        %v1578 = vmul.f32 %v1535, %v1541
        %v1579 = vmul.f32 %v1535, %v1545
        %v1580 = vmul.f32 %v1535, %v1549
        %v1581 = vmul.f32 %v1535, %v1553
        %v1582 = vmul.f32 %v1535, %v1557
        %v1583 = vmul.f32 %v1535, %v1561
        %v1584 = vmul.f32 %v1535, %v1565
        %v1585 = vmul.f32 %v1535, %v1569
        %1586 = vset.pattern.permute.xlu0 3
        %1587 = vperm.xlu0 %1586, %v1199
        %v1588 = vpop.permute.xlu0 %1587
        %v1591 = vlaneseq
        %v1592 = vshrl.u32 %v1591, 7
        %v1593 = vsub.s32 0, %v1592
        %v1594 = vrot.slane %v1532, %v1593
        %v1595 = vlaneseq
        %v1596 = vshrl.u32 %v1595, 7
        %v1597 = vsub.s32 1, %v1596
        %v1598 = vrot.slane %v1532, %v1597
        %v1599 = vlaneseq
        %v1600 = vshrl.u32 %v1599, 7
        %v1601 = vsub.s32 2, %v1600
        %v1602 = vrot.slane %v1532, %v1601
        %v1603 = vlaneseq
        %v1604 = vshrl.u32 %v1603, 7
        %v1605 = vsub.s32 3, %v1604
        %v1606 = vrot.slane %v1532, %v1605
        %v1607 = vlaneseq
        %v1608 = vshrl.u32 %v1607, 7
        %v1609 = vsub.s32 4, %v1608
        %v1610 = vrot.slane %v1532, %v1609
        %v1611 = vlaneseq
        %v1612 = vshrl.u32 %v1611, 7
        %v1613 = vsub.s32 5, %v1612
        %v1614 = vrot.slane %v1532, %v1613
        %v1615 = vlaneseq
        %v1616 = vshrl.u32 %v1615, 7
        %v1617 = vsub.s32 6, %v1616
        %v1618 = vrot.slane %v1532, %v1617
        %v1619 = vlaneseq
        %v1620 = vshrl.u32 %v1619, 7
        %v1621 = vsub.s32 7, %v1620
        %v1622 = vrot.slane %v1532, %v1621
        %v1631 = vmul.f32 %v1588, %v1594
        %v1632 = vmul.f32 %v1588, %v1598
        %v1633 = vmul.f32 %v1588, %v1602
        %v1634 = vmul.f32 %v1588, %v1606
        %v1635 = vmul.f32 %v1588, %v1610
        %v1636 = vmul.f32 %v1588, %v1614
        %v1637 = vmul.f32 %v1588, %v1618
        %v1638 = vmul.f32 %v1588, %v1622
        %v1639 = vadd.f32 %v1578, %v1631
        %v1640 = vadd.f32 %v1579, %v1632
        %v1641 = vadd.f32 %v1580, %v1633
        %v1642 = vadd.f32 %v1581, %v1634
        %v1643 = vadd.f32 %v1582, %v1635
        %v1644 = vadd.f32 %v1583, %v1636
        %v1645 = vadd.f32 %v1584, %v1637
        %v1646 = vadd.f32 %v1585, %v1638
        %1647 = vset.pattern.permute.xlu0 4
        %1648 = vperm.xlu0 %1647, %v1199
        %v1649 = vpop.permute.xlu0 %1648
        %v1651 = vadd.f32 %v1639, %v1649
        %v1652 = vadd.f32 %v1640, %v1649
        %v1653 = vadd.f32 %v1641, %v1649
        %v1654 = vadd.f32 %v1642, %v1649
        %v1655 = vadd.f32 %v1643, %v1649
        %v1656 = vadd.f32 %v1644, %v1649
        %v1657 = vadd.f32 %v1645, %v1649
        %v1658 = vadd.f32 %v1646, %v1649
        %1659 = vset.pattern.permute.xlu0 2
        %1660 = vperm.xlu0 %1659, %v1212
        %v1661 = vpop.permute.xlu0 %1660
        %v1663 = vmul.f32 %v1661, %v1541
        %v1664 = vmul.f32 %v1661, %v1545
        %v1665 = vmul.f32 %v1661, %v1549
        %v1666 = vmul.f32 %v1661, %v1553
        %v1667 = vmul.f32 %v1661, %v1557
        %v1668 = vmul.f32 %v1661, %v1561
        %v1669 = vmul.f32 %v1661, %v1565
        %v1670 = vmul.f32 %v1661, %v1569
        %1671 = vset.pattern.permute.xlu0 3
        %1672 = vperm.xlu0 %1671, %v1212
        %v1673 = vpop.permute.xlu0 %1672
        %v1675 = vmul.f32 %v1673, %v1594
        %v1676 = vmul.f32 %v1673, %v1598
        %v1677 = vmul.f32 %v1673, %v1602
        %v1678 = vmul.f32 %v1673, %v1606
        %v1679 = vmul.f32 %v1673, %v1610
        %v1680 = vmul.f32 %v1673, %v1614
        %v1681 = vmul.f32 %v1673, %v1618
        %v1682 = vmul.f32 %v1673, %v1622
        %v1683 = vadd.f32 %v1663, %v1675
        %v1684 = vadd.f32 %v1664, %v1676
        %v1685 = vadd.f32 %v1665, %v1677
        %v1686 = vadd.f32 %v1666, %v1678
        %v1687 = vadd.f32 %v1667, %v1679
        %v1688 = vadd.f32 %v1668, %v1680
        %v1689 = vadd.f32 %v1669, %v1681
        %v1690 = vadd.f32 %v1670, %v1682
        %1691 = vset.pattern.permute.xlu0 4
        %1692 = vperm.xlu0 %1691, %v1212
        %v1693 = vpop.permute.xlu0 %1692
        %v1695 = vadd.f32 %v1683, %v1693
        %v1696 = vadd.f32 %v1684, %v1693
        %v1697 = vadd.f32 %v1685, %v1693
        %v1698 = vadd.f32 %v1686, %v1693
        %v1699 = vadd.f32 %v1687, %v1693
        %v1700 = vadd.f32 %v1688, %v1693
        %v1701 = vadd.f32 %v1689, %v1693
        %v1702 = vadd.f32 %v1690, %v1693
        %v1703 = vmax.f32 %v1651, %v1695
        %v1704 = vmax.f32 %v1652, %v1696
        %v1705 = vmax.f32 %v1653, %v1697
        %v1706 = vmax.f32 %v1654, %v1698
        %v1707 = vmax.f32 %v1655, %v1699
        %v1708 = vmax.f32 %v1656, %v1700
        %v1709 = vmax.f32 %v1657, %v1701
        %v1710 = vmax.f32 %v1658, %v1702
        %v1711 = vsub.f32 %v1651, %v1703
        %v1712 = vsub.f32 %v1652, %v1704
        %v1713 = vsub.f32 %v1653, %v1705
        %v1714 = vsub.f32 %v1654, %v1706
        %v1715 = vsub.f32 %v1655, %v1707
        %v1716 = vsub.f32 %v1656, %v1708
        %v1717 = vsub.f32 %v1657, %v1709
        %v1718 = vsub.f32 %v1658, %v1710
        %v1719 = vmul.f32 %v1711, 1.442695
        %v1720 = vpow.pop %v1719
        %v1721 = vmul.f32 %v1712, 1.442695
        %v1722 = vpow.pop %v1721
        %v1723 = vmul.f32 %v1713, 1.442695
        %v1724 = vpow.pop %v1723
        %v1725 = vmul.f32 %v1714, 1.442695
        %v1726 = vpow.pop %v1725
        %v1727 = vmul.f32 %v1715, 1.442695
        %v1728 = vpow.pop %v1727
        %v1729 = vmul.f32 %v1716, 1.442695
        %v1730 = vpow.pop %v1729
        %v1731 = vmul.f32 %v1717, 1.442695
        %v1732 = vpow.pop %v1731
        %v1733 = vmul.f32 %v1718, 1.442695
        %v1734 = vpow.pop %v1733
        %v1735 = vsub.f32 %v1695, %v1703
        %v1736 = vsub.f32 %v1696, %v1704
        %v1737 = vsub.f32 %v1697, %v1705
        %v1738 = vsub.f32 %v1698, %v1706
        %v1739 = vsub.f32 %v1699, %v1707
        %v1740 = vsub.f32 %v1700, %v1708
        %v1741 = vsub.f32 %v1701, %v1709
        %v1742 = vsub.f32 %v1702, %v1710
        %v1743 = vmul.f32 %v1735, 1.442695
        %v1744 = vpow.pop %v1743
        %v1745 = vmul.f32 %v1736, 1.442695
        %v1746 = vpow.pop %v1745
        %v1747 = vmul.f32 %v1737, 1.442695
        %v1748 = vpow.pop %v1747
        %v1749 = vmul.f32 %v1738, 1.442695
        %v1750 = vpow.pop %v1749
        %v1751 = vmul.f32 %v1739, 1.442695
        %v1752 = vpow.pop %v1751
        %v1753 = vmul.f32 %v1740, 1.442695
        %v1754 = vpow.pop %v1753
        %v1755 = vmul.f32 %v1741, 1.442695
        %v1756 = vpow.pop %v1755
        %v1757 = vmul.f32 %v1742, 1.442695
        %v1758 = vpow.pop %v1757
        %v1759 = vadd.f32 %v1720, %v1744
        %v1760 = vadd.f32 %v1722, %v1746
        %v1761 = vadd.f32 %v1724, %v1748
        %v1762 = vadd.f32 %v1726, %v1750
        %v1763 = vadd.f32 %v1728, %v1752
        %v1764 = vadd.f32 %v1730, %v1754
        %v1765 = vadd.f32 %v1732, %v1756
        %v1766 = vadd.f32 %v1734, %v1758
        %v1767 = vrcp.pop %v1759
        %v1768 = vmul.f32 1.0, %v1767
        %v1769 = vrcp.pop %v1760
        %v1770 = vmul.f32 1.0, %v1769
        %v1771 = vrcp.pop %v1761
        %v1772 = vmul.f32 1.0, %v1771
        %v1773 = vrcp.pop %v1762
        %v1774 = vmul.f32 1.0, %v1773
        %v1775 = vrcp.pop %v1763
        %v1776 = vmul.f32 1.0, %v1775
        %v1777 = vrcp.pop %v1764
        %v1778 = vmul.f32 1.0, %v1777
        %v1779 = vrcp.pop %v1765
        %v1780 = vmul.f32 1.0, %v1779
        %v1781 = vrcp.pop %v1766
        %v1782 = vmul.f32 1.0, %v1781
        %v1783 = vmul.f32 %v1720, %v1768
        %v1784 = vmul.f32 %v1722, %v1770
        %v1785 = vmul.f32 %v1724, %v1772
        %v1786 = vmul.f32 %v1726, %v1774
        %v1787 = vmul.f32 %v1728, %v1776
        %v1788 = vmul.f32 %v1730, %v1778
        %v1789 = vmul.f32 %v1732, %v1780
        %v1790 = vmul.f32 %v1734, %v1782
        %v1799 = vcombine.low %v1783, %v1784
        %v1800 = vcombine.low %v1785, %v1786
        %v1801 = vcombine.low %v1787, %v1788
        %v1802 = vcombine.low %v1789, %v1790
        %v1804 = vunpack.c.l.s4 1966171168
        %v1805 = vunpack.c.0.s8 %v1804
        %v1806 = vlaneseq
        %v1807 = vshrl.u32 %v1806, 7
        %v1808 = vsub.s32 %v1805, %v1807
        %v1809 = vrot.slane %v1799, %v1808
        %v1811 = vunpack.c.l.s4 1966171168
        %v1812 = vunpack.c.0.s8 %v1811
        %v1813 = vlaneseq
        %v1814 = vshrl.u32 %v1813, 7
        %v1815 = vsub.s32 %v1812, %v1814
        %v1816 = vrot.slane %v1800, %v1815
        %v1818 = vunpack.c.l.s4 1966171168
        %v1819 = vunpack.c.0.s8 %v1818
        %v1820 = vlaneseq
        %v1821 = vshrl.u32 %v1820, 7
        %v1822 = vsub.s32 %v1819, %v1821
        %v1823 = vrot.slane %v1801, %v1822
        %v1825 = vunpack.c.l.s4 1966171168
        %v1826 = vunpack.c.0.s8 %v1825
        %v1827 = vlaneseq
        %v1828 = vshrl.u32 %v1827, 7
        %v1829 = vsub.s32 %v1826, %v1828
        %v1830 = vrot.slane %v1802, %v1829
        %v1831 = vcombine.low %v1809, %v1816
        %v1832 = vcombine.low %v1823, %v1830
        %v1834 = vunpack.c.l.s4 1966171168
        %v1835 = vunpack.c.0.s8 %v1834
        %v1836 = vlaneseq
        %v1837 = vshrl.u32 %v1836, 7
        %v1838 = vsub.s32 %v1835, %v1837
        %v1839 = vrot.slane %v1831, %v1838
        %v1841 = vunpack.c.l.s4 1966171168
        %v1842 = vunpack.c.0.s8 %v1841
        %v1843 = vlaneseq
        %v1844 = vshrl.u32 %v1843, 7
        %v1845 = vsub.s32 %v1842, %v1844
        %v1846 = vrot.slane %v1832, %v1845
        %v1847 = vcombine.low %v1839, %v1846
        %1849 = vst [vmem:[%s3] ss:$2 sm:$0xff] %v1847
        %v1850 = vmul.f32 %v1744, %v1768
        %v1851 = vmul.f32 %v1746, %v1770
        %v1852 = vmul.f32 %v1748, %v1772
        %v1853 = vmul.f32 %v1750, %v1774
        %v1854 = vmul.f32 %v1752, %v1776
        %v1855 = vmul.f32 %v1754, %v1778
        %v1856 = vmul.f32 %v1756, %v1780
        %v1857 = vmul.f32 %v1758, %v1782
        %v1866 = vcombine.low %v1850, %v1851
        %v1867 = vcombine.low %v1852, %v1853
        %v1868 = vcombine.low %v1854, %v1855
        %v1869 = vcombine.low %v1856, %v1857
        %v1871 = vunpack.c.l.s4 1966171168
        %v1872 = vunpack.c.0.s8 %v1871
        %v1873 = vlaneseq
        %v1874 = vshrl.u32 %v1873, 7
        %v1875 = vsub.s32 %v1872, %v1874
        %v1876 = vrot.slane %v1866, %v1875
        %v1878 = vunpack.c.l.s4 1966171168
        %v1879 = vunpack.c.0.s8 %v1878
        %v1880 = vlaneseq
        %v1881 = vshrl.u32 %v1880, 7
        %v1882 = vsub.s32 %v1879, %v1881
        %v1883 = vrot.slane %v1867, %v1882
        %v1885 = vunpack.c.l.s4 1966171168
        %v1886 = vunpack.c.0.s8 %v1885
        %v1887 = vlaneseq
        %v1888 = vshrl.u32 %v1887, 7
        %v1889 = vsub.s32 %v1886, %v1888
        %v1890 = vrot.slane %v1868, %v1889
        %v1892 = vunpack.c.l.s4 1966171168
        %v1893 = vunpack.c.0.s8 %v1892
        %v1894 = vlaneseq
        %v1895 = vshrl.u32 %v1894, 7
        %v1896 = vsub.s32 %v1893, %v1895
        %v1897 = vrot.slane %v1869, %v1896
        %v1898 = vcombine.low %v1876, %v1883
        %v1899 = vcombine.low %v1890, %v1897
        %v1901 = vunpack.c.l.s4 1966171168
        %v1902 = vunpack.c.0.s8 %v1901
        %v1903 = vlaneseq
        %v1904 = vshrl.u32 %v1903, 7
        %v1905 = vsub.s32 %v1902, %v1904
        %v1906 = vrot.slane %v1898, %v1905
        %v1908 = vunpack.c.l.s4 1966171168
        %v1909 = vunpack.c.0.s8 %v1908
        %v1910 = vlaneseq
        %v1911 = vshrl.u32 %v1910, 7
        %v1912 = vsub.s32 %v1909, %v1911
        %v1913 = vrot.slane %v1899, %v1912
        %v1914 = vcombine.low %v1906, %v1913
        %s1916 = scalar_lea.vmem %s3, 1
        %1917 = vst [vmem:[%s1916] ss:$2 sm:$0xff] %v1914
      $region40: #{artinet_forward.5} parent=31 // pred_fallthru
        _
      // Predicated region
      $region41: #{artinet_forward.5} parent=31 // pred_check
        %p1918 = pneg %p100
      $region42: #{artinet_forward.5} parent=31 // pred_check_branch
        %1920 = sbr.rel (%p1918) target = $region44
      $region43: #{artinet_forward.5} parent=31 // pred_region
        _
      $region44: #{artinet_forward.5} parent=31 // pred_fallthru
        _
      // Predicated region
      $region45: #{artinet_forward.5} parent=31 // pred_check
        %p1921 = pneg %p100
      $region46: #{artinet_forward.5} parent=31 // pred_check_branch
        %1923 = sbr.rel (%p1921) target = $region48
      $region47: #{artinet_forward.5} parent=31 // pred_region
        _
      $region48: #{artinet_forward.5} parent=31 // pred_fallthru
        _
    $region32: #{artinet_forward.5} parent=5 // pred_fallthru
      _
    %p1924 = scmp.le.s32.totalorder 2, %s9
    // Predicated region
    $region49: #{artinet_forward.5} parent=5 // pred_check
      %p1925 = pneg %p1924
    $region50: #{artinet_forward.5} parent=5 // pred_check_branch
      %1927 = sbr.rel (%p1925) target = $region52
    $region51: #{artinet_forward.5} parent=5 // pred_region
      %s1928 = ssub.s32 %s9, 2
    $region52: #{artinet_forward.5} parent=5 // pred_fallthru
      _
  $region6: #{artinet_forward.5} parent=0 // loop_footer
    %s13 = sadd.s32 1, %s9
  $region7: #{artinet_forward.5} parent=0 // loop_footer_branch
    %8 = sbr.rel target = $region3
  $region8: #{artinet_forward.5} parent=0 // loop_exit
    _

</llo_original>
